<compile_context>
chip_gen: v6e
topology: v6e:2x2x1
jax: 0.10.0
libtpu: 0.0.40
codegen_flags: <defaults>
</compile_context>

<pallas_src>
import functools
import math

import jax
import jax.numpy as jnp
from jax.experimental import pallas as pl
from jax.experimental.pallas import tpu as pltpu


def _round_up(x, m):
    return (x + m - 1) // m * m


def _cnn_l2_ranking_kernel(
    x_ref,        # (TB*S, KE_pad)  bf16  im2col block of conv input
    w_ref,        # (KE_pad, H_pad) bf16  flattened conv weight (zero padded)
    aux_ref,      # (8, H_pad)      f32   row0=conv bias, row1=LN w, row2=LN b
    rel_ref,      # (H_pad, R_pad)  bf16  relation embedding (zero padded)
    lab_ref,      # (TB, 1)         i32   gold relation index per sample
    out_ref,      # (8, 128)        f32   per-block loss sum (broadcast)
    *,
    seq_len,
    hidden_dim,
    num_relations,
    true_batch,
    batch_tile,
    gamma,
    m_plus,
    m_minus,
):
    TB = batch_tile
    S = seq_len
    H_pad = w_ref.shape[1]
    R_pad = rel_ref.shape[1]

    # ---- Conv1d('same'): single im2col matmul on the MXU (bf16 in, f32 acc) ----
    acc = jnp.dot(x_ref[...], w_ref[...], preferred_element_type=jnp.float32)

    # ---- max-pool over S first; bias add + ReLU commute with the max, so they
    #      are applied once on the (TB, H_pad) pooled tensor instead of the big
    #      (TB*S, H_pad) intermediate (saves 2 VPU passes + vld/vst traffic) ----
    pooled = jnp.max(acc.reshape(TB, S, H_pad), axis=1)            # (TB, H_pad)
    hidden = jnp.maximum(pooled + aux_ref[0:1, :], 0.0)            # padded lanes stay 0

    # ---- LayerNorm over the true hidden_dim (padded lanes excluded) ----
    h_mask = jax.lax.broadcasted_iota(jnp.int32, (TB, H_pad), 1) < hidden_dim
    inv_h = 1.0 / float(hidden_dim)
    mean = jnp.sum(hidden, axis=-1, keepdims=True) * inv_h
    centered = jnp.where(h_mask, hidden - mean, 0.0)
    var = jnp.sum(centered * centered, axis=-1, keepdims=True) * inv_h
    inv_std = jax.lax.rsqrt(var + 1e-5)
    hidden = centered * inv_std * aux_ref[1:2, :] + aux_ref[2:3, :]

    # ---- Relation scores (bf16 operands, f32 accumulation) ----
    scores = jnp.dot(hidden.astype(rel_ref.dtype), rel_ref[...],
                     preferred_element_type=jnp.float32)           # (TB, R_pad)

    # gold-relation mask built from iota == label (replaces the f32 one-hot input)
    lbl = lab_ref[...]                                             # (TB, 1) int32
    rel_iota = jax.lax.broadcasted_iota(jnp.int32, (TB, R_pad), 1)
    gold = rel_iota == lbl

    # positive score: score at the gold relation
    positive = jnp.sum(jnp.where(gold, scores, 0.0), axis=-1, keepdims=True)

    # negative score: max over valid relations != gold relation
    # (equivalent to torch top-2 + where(top1 == label, second, first))
    keep = jnp.logical_and(rel_iota < num_relations, jnp.logical_not(gold))
    negative = jnp.max(jnp.where(keep, scores, -jnp.inf), axis=-1, keepdims=True)

    def softplus(z):  # stable log(1 + exp(z)); EUP exp/log, VPU select is free
        return jnp.maximum(z, 0.0) + jnp.log(1.0 + jnp.exp(-jnp.abs(z)))

    loss = (softplus(gamma * (m_plus - positive))
            + softplus(gamma * (m_minus + negative)))              # (TB, 1)

    # ---- mask padded batch rows and reduce to a per-block partial sum ----
    row = pl.program_id(0) * TB + jax.lax.broadcasted_iota(jnp.int32, (TB, 1), 0)
    loss = jnp.where(row < true_batch, loss, 0.0)
    out_ref[...] = jnp.broadcast_to(jnp.sum(loss, keepdims=True), out_ref.shape)


def cnn_l2_ranking_loss(total_embed, conv_w, conv_b, ln_w, ln_b, rel_emb,
                        label_relation, *, kernel_size, gamma, m_plus, m_minus,
                        batch_tile=256, mxu_dtype=jnp.bfloat16):
    """total_embed: (B, S, E); conv_w: (K, E, H); rel_emb: (H, R)."""
    B, S, E = total_embed.shape
    K = kernel_size
    H = conv_w.shape[-1]
    R = rel_emb.shape[-1]

    KE = K * E
    KE_pad = _round_up(KE, 128)
    H_pad = _round_up(H, 128)
    R_pad = _round_up(R, 128)

    # Large batch tile to amortize per-step pipeline overhead, but keep >= 2
    # grid steps when B allows so both v7x TensorCores get work.
    TB = max(8, min(_round_up(batch_tile, 8), _round_up(B, 8)))
    if B > 8 and _round_up(B, TB) // TB < 2:
        TB = max(8, _round_up((B + 1) // 2, 8))
    B_pad = _round_up(B, TB)
    num_blocks = B_pad // TB

    # TODO(synk): input_drop / hidden_drop use eval-mode (identity) semantics.

    if B_pad != B:
        total_embed = jnp.pad(total_embed, ((0, B_pad - B), (0, 0), (0, 0)))

    # ---- wrapper-side im2col (layout plumbing: free in-kernel) ----
    pad = K // 2
    x_p = jnp.pad(total_embed, ((0, 0), (pad, pad), (0, 0)))        # (B_pad, S+K-1, E)
    cols = [x_p[:, k:k + S, :] for k in range(K)]
    x_col = jnp.concatenate(cols, axis=-1).reshape(B_pad * S, KE)   # (B_pad*S, K*E)
    x_col = jnp.pad(x_col, ((0, 0), (0, KE_pad - KE))).astype(mxu_dtype)

    w_flat = conv_w.reshape(KE, H)
    w_flat = jnp.pad(w_flat, ((0, KE_pad - KE), (0, H_pad - H))).astype(mxu_dtype)

    # packed aux params (one (8, H_pad) tile instead of three (1, H) inputs)
    aux = jnp.zeros((8, H_pad), jnp.float32)
    aux = aux.at[0, :H].set(conv_b.reshape(-1))
    aux = aux.at[1, :H].set(ln_w.reshape(-1))
    aux = aux.at[2, :H].set(ln_b.reshape(-1))

    # relation embedding as bf16 (MXU operand); f32 accumulation in-kernel
    rel_pad = jnp.zeros((H_pad, R_pad), mxu_dtype).at[:H, :R].set(
        rel_emb.astype(mxu_dtype))

    # int32 labels instead of f32 one-hot: 4 bytes/sample of HBM traffic
    labels = label_relation.astype(jnp.int32).reshape(B, 1)
    if B_pad != B:
        labels = jnp.pad(labels, ((0, B_pad - B), (0, 0)))

    kernel = functools.partial(
        _cnn_l2_ranking_kernel,
        seq_len=S, hidden_dim=H, num_relations=R,
        true_batch=B, batch_tile=TB,
        gamma=gamma, m_plus=m_plus, m_minus=m_minus,
    )

    # VMEM budget: double-buffered x stream + in-kernel f32 intermediates +
    # resident weight/aux/rel tiles.  Clamp to [32 MiB, 64 MiB] so the request
    # is valid on v7x (64 MiB/TC) as well as v5e/v6e (128 MiB).
    x_blk_bytes = TB * S * KE_pad * 2
    inter_bytes = TB * S * H_pad * 4
    resident_bytes = 2 * (KE_pad * H_pad * 2 + 8 * H_pad * 4 + H_pad * R_pad * 2)
    vmem_est = 2 * x_blk_bytes + 3 * inter_bytes + resident_bytes \
        + 2 * (TB * 4 + 8 * 128 * 4)
    vmem_limit = int(min(max(32 * 1024 * 1024, 3 * vmem_est // 2),
                         64 * 1024 * 1024))

    out = pl.pallas_call(
        kernel,
        out_shape=jax.ShapeDtypeStruct((num_blocks * 8, 128), jnp.float32),
        grid=(num_blocks,),
        in_specs=[
            pl.BlockSpec((TB * S, KE_pad), lambda i: (i, 0)),   # x im2col block
            pl.BlockSpec((KE_pad, H_pad), lambda i: (0, 0)),    # conv weight (resident)
            pl.BlockSpec((8, H_pad), lambda i: (0, 0)),         # packed bias/LN params
            pl.BlockSpec((H_pad, R_pad), lambda i: (0, 0)),     # relation embedding
            pl.BlockSpec((TB, 1), lambda i: (i, 0)),            # int32 labels block
        ],
        out_specs=pl.BlockSpec((8, 128), lambda i: (i, 0)),     # per-block loss sum
        compiler_params=pltpu.CompilerParams(
            dimension_semantics=("parallel",),       # batch axis -> both TCs on v7x
            vmem_limit_bytes=vmem_limit,
        ),
    )(x_col, w_flat, aux, rel_pad, labels)

    # each block's 8 output rows carry the same block sum; take one per block
    return jnp.sum(out[::8, 0]) / B


def _reference_loss(total_embed, conv_w, conv_b, ln_w, ln_b, rel_emb,
                    label_relation, *, kernel_size, gamma, m_plus, m_minus,
                    mxu_dtype=jnp.bfloat16):
    """Pure-JAX reference mirroring the PyTorch module (eval-mode dropout)."""
    B, S, E = total_embed.shape
    K = kernel_size
    H = conv_w.shape[-1]
    R = rel_emb.shape[-1]
    pad = K // 2
    x_p = jnp.pad(total_embed, ((0, 0), (pad, pad), (0, 0)))
    cols = [x_p[:, k:k + S, :] for k in range(K)]
    x_col = jnp.concatenate(cols, axis=-1).reshape(B * S, K * E)
    x_col = x_col.astype(mxu_dtype).astype(jnp.float32)
    w_flat = conv_w.reshape(K * E, H).astype(mxu_dtype).astype(jnp.float32)
    acc = x_col @ w_flat + conv_b.reshape(1, H)
    hidden = jnp.max(jnp.maximum(acc, 0.0).reshape(B, S, H), axis=1)
    mean = hidden.mean(-1, keepdims=True)
    var = ((hidden - mean) ** 2).mean(-1, keepdims=True)
    hidden = (hidden - mean) * jax.lax.rsqrt(var + 1e-5) * ln_w.reshape(1, H) \
        + ln_b.reshape(1, H)
    scores = hidden.astype(mxu_dtype).astype(jnp.float32) \
        @ rel_emb.astype(mxu_dtype).astype(jnp.float32)
    onehot = jax.nn.one_hot(label_relation, R, dtype=jnp.float32)
    pos = jnp.sum(scores * onehot, axis=-1)
    neg = jnp.max(jnp.where(onehot > 0, -jnp.inf, scores), axis=-1)
    sp = lambda z: jnp.maximum(z, 0.0) + jnp.log(1.0 + jnp.exp(-jnp.abs(z)))
    return jnp.mean(sp(gamma * (m_plus - pos)) + sp(gamma * (m_minus + neg)))


if __name__ == "__main__":
    # ---- synthetic config (small) ----
    B = 64               # batch (auto-split into 2 tiles of 32 -> grid=(2,))
    S = 16               # sequence length
    WORD_DIM = 16        # word_embedding_dim
    POS_DIM = 8          # position_embedding_dim
    E = WORD_DIM + 2 * POS_DIM   # 32, CNN input dim
    H = 32               # hidden_dim
    K = 3                # kernel_size ('same' padding = K // 2)
    R = 8                # relation_vocab.size()
    WORD_VOCAB = 50
    POS_VOCAB = 64
    WORD_PAD_IDX = 0
    POS_PAD_IDX = 0
    GAMMA = 2.0
    M_PLUS = 2.5
    M_MINUS = 0.5

    key = jax.random.PRNGKey(0)
    keys = jax.random.split(key, 12)

    # ---- deterministic parameter init ----
    word_emb = jax.random.normal(keys[0], (WORD_VOCAB, WORD_DIM), jnp.float32)
    word_emb = word_emb.at[WORD_PAD_IDX].set(0.0)
    head_pos_emb = jax.random.normal(keys[1], (POS_VOCAB, POS_DIM), jnp.float32)
    head_pos_emb = head_pos_emb.at[POS_PAD_IDX].set(0.0)
    tail_pos_emb = jax.random.normal(keys[2], (POS_VOCAB, POS_DIM), jnp.float32)
    tail_pos_emb = tail_pos_emb.at[POS_PAD_IDX].set(0.0)

    # CNNEncoder: Conv1d(E, H, K) + ReLU + max-over-time
    fan_in = E * K
    bound = 1.0 / math.sqrt(fan_in)
    conv_w = jax.random.uniform(keys[3], (K, E, H), jnp.float32, -bound, bound)
    conv_b = jax.random.uniform(keys[4], (H,), jnp.float32, -bound, bound)

    ln_w = jnp.ones((H,), jnp.float32)
    ln_b = jnp.zeros((H,), jnp.float32)

    rel_scale = math.sqrt(6.0 / (R + H))
    rel_emb = jax.random.uniform(keys[5], (H, R), jnp.float32, -rel_scale, rel_scale)

    # ---- deterministic example inputs ----
    word_ids = jax.random.randint(keys[6], (B, S), 1, WORD_VOCAB)
    head_pos_ids = jax.random.randint(keys[7], (B, S), 1, POS_VOCAB)
    tail_pos_ids = jax.random.randint(keys[8], (B, S), 1, POS_VOCAB)
    label_relation = jax.random.randint(keys[9], (B,), 0, R)

    # ---- JAX glue: embedding lookups + concat ----
    we = word_emb[word_ids]           # (B, S, WORD_DIM)
    hpe = head_pos_emb[head_pos_ids]  # (B, S, POS_DIM)
    tpe = tail_pos_emb[tail_pos_ids]  # (B, S, POS_DIM)
    total_embed = jnp.concatenate([we, hpe, tpe], axis=-1)  # (B, S, E)

    loss = cnn_l2_ranking_loss(
        total_embed, conv_w, conv_b, ln_w, ln_b, rel_emb, label_relation,
        kernel_size=K, gamma=GAMMA, m_plus=M_PLUS, m_minus=M_MINUS,
        batch_tile=256, mxu_dtype=jnp.bfloat16,
    )
    jax.block_until_ready(loss)
    assert jnp.isfinite(loss)

    ref = _reference_loss(
        total_embed, conv_w, conv_b, ln_w, ln_b, rel_emb, label_relation,
        kernel_size=K, gamma=GAMMA, m_plus=M_PLUS, m_minus=M_MINUS,
        mxu_dtype=jnp.bfloat16,
    )
    jax.block_until_ready(ref)
    assert jnp.allclose(loss, ref, rtol=1e-2, atol=1e-2), (loss, ref)

    print("KERNEL_OK")
</pallas_src>

<mosaic_0001>
module attributes {stable_mosaic.version = 11 : i64} {
  func.func @_cnn_l2_ranking_kernel(%arg0: i32, %arg1: memref<512x128xbf16, #tpu.memory_space<vmem>>, %arg2: memref<128x128xbf16, #tpu.memory_space<vmem>>, %arg3: memref<8x128xf32, #tpu.memory_space<vmem>>, %arg4: memref<128x128xbf16, #tpu.memory_space<vmem>>, %arg5: memref<32x1xi32, #tpu.memory_space<vmem>>, %arg6: memref<8x128xf32, #tpu.memory_space<vmem>>) attributes {dimension_semantics = [#tpu.dimension_semantics<parallel>], iteration_bounds = array<i64: 2>, scalar_prefetch = 0 : i64, scratch_operands = 0 : i64, tpu.core_type = #tpu.core_type<tc>, window_params = [{transform_indices = @transform_0, window_bounds = array<i64: 512, 128>}, {pipeline_mode = #tpu.pipeline_mode<synchronous>, transform_indices = @transform_1, window_bounds = array<i64: 128, 128>}, {pipeline_mode = #tpu.pipeline_mode<synchronous>, transform_indices = @transform_2, window_bounds = array<i64: 8, 128>}, {pipeline_mode = #tpu.pipeline_mode<synchronous>, transform_indices = @transform_3, window_bounds = array<i64: 128, 128>}, {transform_indices = @transform_4, window_bounds = array<i64: 32, 1>}, {transform_indices = @transform_5, window_bounds = array<i64: 8, 128>}]} {
    %c0 = arith.constant 0 : index
    %c0_0 = arith.constant 0 : index
    %0 = vector.load %arg1[%c0, %c0_0] : memref<512x128xbf16, #tpu.memory_space<vmem>>, vector<512x128xbf16>
    %c0_1 = arith.constant 0 : index
    %c0_2 = arith.constant 0 : index
    %1 = vector.load %arg2[%c0_1, %c0_2] : memref<128x128xbf16, #tpu.memory_space<vmem>>, vector<128x128xbf16>
    %cst = arith.constant dense<0.000000e+00> : vector<512x128xf32>
    %2 = tpu.matmul %0, %1, %cst {dimension_numbers = #tpu.dot_dimension_numbers<[1], [0], [0], [1], [0, 0, 1, 1], [], []>} : vector<512x128xbf16>, vector<128x128xbf16>, vector<512x128xf32> -> vector<512x128xf32>
    %3 = vector.shape_cast %2 : vector<512x128xf32> to vector<32x16x128xf32>
    %cst_3 = arith.constant dense<0xFF800000> : vector<32x128xf32>
    %4 = vector.multi_reduction <maximumf>, %3, %cst_3 [1] : vector<32x16x128xf32> to vector<32x128xf32>
    %c0_4 = arith.constant 0 : index
    %c0_5 = arith.constant 0 : index
    %5 = vector.load %arg3[%c0_4, %c0_5] : memref<8x128xf32, #tpu.memory_space<vmem>>, vector<1x128xf32>
    %6 = vector.broadcast %5 : vector<1x128xf32> to vector<32x128xf32>
    %7 = arith.addf %4, %6 : vector<32x128xf32>
    %cst_6 = arith.constant 0.000000e+00 : f32
    %8 = vector.broadcast %cst_6 : f32 to vector<32x128xf32>
    %9 = arith.maximumf %7, %8 : vector<32x128xf32>
    %10 = tpu.iota {dimensions = array<i32: 1>} : vector<32x128xi32>
    %c32_i32 = arith.constant 32 : i32
    %11 = vector.broadcast %c32_i32 : i32 to vector<32x128xi32>
    %12 = arith.cmpi slt, %10, %11 : vector<32x128xi32>
    %cst_7 = arith.constant dense<0.000000e+00> : vector<32xf32>
    %13 = vector.multi_reduction <add>, %9, %cst_7 [1] : vector<32x128xf32> to vector<32xf32>
    %14 = vector.shape_cast %13 : vector<32xf32> to vector<32x1xf32>
    %cst_8 = arith.constant 3.125000e-02 : f32
    %15 = vector.broadcast %cst_8 : f32 to vector<32x1xf32>
    %16 = arith.mulf %14, %15 : vector<32x1xf32>
    %17 = vector.broadcast %16 : vector<32x1xf32> to vector<32x128xf32>
    %18 = arith.subf %9, %17 : vector<32x128xf32>
    %cst_9 = arith.constant 0.000000e+00 : f32
    %19 = vector.broadcast %cst_9 : f32 to vector<32x128xf32>
    %20 = arith.select %12, %18, %19 : vector<32x128xi1>, vector<32x128xf32>
    %21 = arith.mulf %20, %20 : vector<32x128xf32>
    %cst_10 = arith.constant dense<0.000000e+00> : vector<32xf32>
    %22 = vector.multi_reduction <add>, %21, %cst_10 [1] : vector<32x128xf32> to vector<32xf32>
    %23 = vector.shape_cast %22 : vector<32xf32> to vector<32x1xf32>
    %cst_11 = arith.constant 3.125000e-02 : f32
    %24 = vector.broadcast %cst_11 : f32 to vector<32x1xf32>
    %25 = arith.mulf %23, %24 : vector<32x1xf32>
    %cst_12 = arith.constant 9.99999974E-6 : f32
    %26 = vector.broadcast %cst_12 : f32 to vector<32x1xf32>
    %27 = arith.addf %25, %26 : vector<32x1xf32>
    %28 = math.rsqrt %27 : vector<32x1xf32>
    %29 = vector.broadcast %28 : vector<32x1xf32> to vector<32x128xf32>
    %30 = arith.mulf %20, %29 : vector<32x128xf32>
    %c1 = arith.constant 1 : index
    %c0_13 = arith.constant 0 : index
    %31 = vector.load %arg3[%c1, %c0_13] : memref<8x128xf32, #tpu.memory_space<vmem>>, vector<1x128xf32>
    %32 = vector.broadcast %31 : vector<1x128xf32> to vector<32x128xf32>
    %33 = arith.mulf %30, %32 : vector<32x128xf32>
    %c2 = arith.constant 2 : index
    %c0_14 = arith.constant 0 : index
    %34 = vector.load %arg3[%c2, %c0_14] : memref<8x128xf32, #tpu.memory_space<vmem>>, vector<1x128xf32>
    %35 = vector.broadcast %34 : vector<1x128xf32> to vector<32x128xf32>
    %36 = arith.addf %33, %35 : vector<32x128xf32>
    %37 = arith.truncf %36 : vector<32x128xf32> to vector<32x128xbf16>
    %c0_15 = arith.constant 0 : index
    %c0_16 = arith.constant 0 : index
    %38 = vector.load %arg4[%c0_15, %c0_16] : memref<128x128xbf16, #tpu.memory_space<vmem>>, vector<128x128xbf16>
    %cst_17 = arith.constant dense<0.000000e+00> : vector<32x128xf32>
    %39 = tpu.matmul %37, %38, %cst_17 {dimension_numbers = #tpu.dot_dimension_numbers<[1], [0], [0], [1], [0, 0, 1, 1], [], []>} : vector<32x128xbf16>, vector<128x128xbf16>, vector<32x128xf32> -> vector<32x128xf32>
    %c0_18 = arith.constant 0 : index
    %c0_19 = arith.constant 0 : index
    %40 = vector.load %arg5[%c0_18, %c0_19] : memref<32x1xi32, #tpu.memory_space<vmem>>, vector<32x1xi32>
    %41 = tpu.iota {dimensions = array<i32: 1>} : vector<32x128xi32>
    %42 = vector.broadcast %40 : vector<32x1xi32> to vector<32x128xi32>
    %43 = arith.cmpi eq, %41, %42 : vector<32x128xi32>
    %cst_20 = arith.constant 0.000000e+00 : f32
    %44 = vector.broadcast %cst_20 : f32 to vector<32x128xf32>
    %45 = arith.select %43, %39, %44 : vector<32x128xi1>, vector<32x128xf32>
    %cst_21 = arith.constant dense<0.000000e+00> : vector<32xf32>
    %46 = vector.multi_reduction <add>, %45, %cst_21 [1] : vector<32x128xf32> to vector<32xf32>
    %47 = vector.shape_cast %46 : vector<32xf32> to vector<32x1xf32>
    %c8_i32 = arith.constant 8 : i32
    %48 = vector.broadcast %c8_i32 : i32 to vector<32x128xi32>
    %49 = arith.cmpi slt, %41, %48 : vector<32x128xi32>
    %cst_22 = arith.constant dense<true> : vector<32x128xi1>
    %50 = arith.xori %43, %cst_22 : vector<32x128xi1>
    %51 = arith.andi %49, %50 : vector<32x128xi1>
    %cst_23 = arith.constant 0xFF800000 : f32
    %52 = vector.broadcast %cst_23 : f32 to vector<32x128xf32>
    %53 = arith.select %51, %39, %52 : vector<32x128xi1>, vector<32x128xf32>
    %cst_24 = arith.constant dense<0xFF800000> : vector<32xf32>
    %54 = vector.multi_reduction <maximumf>, %53, %cst_24 [1] : vector<32x128xf32> to vector<32xf32>
    %55 = vector.shape_cast %54 : vector<32xf32> to vector<32x1xf32>
    %cst_25 = arith.constant 2.500000e+00 : f32
    %56 = vector.broadcast %cst_25 : f32 to vector<32x1xf32>
    %57 = arith.subf %56, %47 : vector<32x1xf32>
    %cst_26 = arith.constant 2.000000e+00 : f32
    %58 = vector.broadcast %cst_26 : f32 to vector<32x1xf32>
    %59 = arith.mulf %58, %57 : vector<32x1xf32>
    %cst_27 = arith.constant 0.000000e+00 : f32
    %60 = vector.broadcast %cst_27 : f32 to vector<32x1xf32>
    %61 = arith.maximumf %59, %60 : vector<32x1xf32>
    %62 = math.absf %59 : vector<32x1xf32>
    %cst_28 = arith.constant 0.000000e+00 : f32
    %63 = vector.broadcast %cst_28 : f32 to vector<32x1xf32>
    %64 = arith.subf %63, %62 : vector<32x1xf32>
    %65 = math.exp %64 : vector<32x1xf32>
    %cst_29 = arith.constant 1.000000e+00 : f32
    %66 = vector.broadcast %cst_29 : f32 to vector<32x1xf32>
    %67 = arith.addf %66, %65 : vector<32x1xf32>
    %68 = math.log %67 : vector<32x1xf32>
    %69 = arith.addf %61, %68 : vector<32x1xf32>
    %cst_30 = arith.constant 5.000000e-01 : f32
    %70 = vector.broadcast %cst_30 : f32 to vector<32x1xf32>
    %71 = arith.addf %70, %55 : vector<32x1xf32>
    %cst_31 = arith.constant 2.000000e+00 : f32
    %72 = vector.broadcast %cst_31 : f32 to vector<32x1xf32>
    %73 = arith.mulf %72, %71 : vector<32x1xf32>
    %cst_32 = arith.constant 0.000000e+00 : f32
    %74 = vector.broadcast %cst_32 : f32 to vector<32x1xf32>
    %75 = arith.maximumf %73, %74 : vector<32x1xf32>
    %76 = math.absf %73 : vector<32x1xf32>
    %cst_33 = arith.constant 0.000000e+00 : f32
    %77 = vector.broadcast %cst_33 : f32 to vector<32x1xf32>
    %78 = arith.subf %77, %76 : vector<32x1xf32>
    %79 = math.exp %78 : vector<32x1xf32>
    %cst_34 = arith.constant 1.000000e+00 : f32
    %80 = vector.broadcast %cst_34 : f32 to vector<32x1xf32>
    %81 = arith.addf %80, %79 : vector<32x1xf32>
    %82 = math.log %81 : vector<32x1xf32>
    %83 = arith.addf %75, %82 : vector<32x1xf32>
    %84 = arith.addf %69, %83 : vector<32x1xf32>
    %c32_i32_35 = arith.constant 32 : i32
    %85 = arith.muli %arg0, %c32_i32_35 : i32
    %86 = tpu.iota {dimensions = array<i32: 0>} : vector<32x1xi32>
    %87 = vector.broadcast %85 : i32 to vector<32x1xi32>
    %88 = arith.addi %87, %86 : vector<32x1xi32>
    %c64_i32 = arith.constant 64 : i32
    %89 = vector.broadcast %c64_i32 : i32 to vector<32x1xi32>
    %90 = arith.cmpi slt, %88, %89 : vector<32x1xi32>
    %cst_36 = arith.constant 0.000000e+00 : f32
    %91 = vector.broadcast %cst_36 : f32 to vector<32x1xf32>
    %92 = arith.select %90, %84, %91 : vector<32x1xi1>, vector<32x1xf32>
    %93 = vector.shape_cast %92 : vector<32x1xf32> to vector<1x32x1xf32>
    %cst_37 = arith.constant dense<0.000000e+00> : vector<1xf32>
    %94 = vector.multi_reduction <add>, %93, %cst_37 [1, 2] : vector<1x32x1xf32> to vector<1xf32>
    %95 = vector.shape_cast %94 : vector<1xf32> to vector<1x1x1xf32>
    %96 = vector.extract %95[0, 0, 0] : f32 from vector<1x1x1xf32>
    %97 = vector.broadcast %96 : f32 to vector<1x1xf32>
    %98 = vector.shape_cast %97 : vector<1x1xf32> to vector<1x1xf32>
    %99 = vector.broadcast %98 : vector<1x1xf32> to vector<8x128xf32>
    %c0_38 = arith.constant 0 : index
    %c0_39 = arith.constant 0 : index
    %100 = vector.load %arg6[%c0_38, %c0_39] : memref<8x128xf32, #tpu.memory_space<vmem>>, vector<8x128xf32>
    tpu.vector_store %arg6[%c0_38, %c0_39], %99 {strides = array<i32>} : memref<8x128xf32, #tpu.memory_space<vmem>>, vector<8x128xf32>,
    return
  }
  func.func @transform_0(%arg0: i32) -> (i32, i32) {
    %c0_i32 = arith.constant 0 : i32
    %c0_i32_0 = arith.constant 0 : i32
    return %arg0, %c0_i32 : i32, i32
  }
  func.func @transform_1(%arg0: i32) -> (i32, i32) {
    %c0_i32 = arith.constant 0 : i32
    %c0_i32_0 = arith.constant 0 : i32
    %c0_i32_1 = arith.constant 0 : i32
    return %c0_i32, %c0_i32_0 : i32, i32
  }
  func.func @transform_2(%arg0: i32) -> (i32, i32) {
    %c0_i32 = arith.constant 0 : i32
    %c0_i32_0 = arith.constant 0 : i32
    %c0_i32_1 = arith.constant 0 : i32
    return %c0_i32, %c0_i32_0 : i32, i32
  }
  func.func @transform_3(%arg0: i32) -> (i32, i32) {
    %c0_i32 = arith.constant 0 : i32
    %c0_i32_0 = arith.constant 0 : i32
    %c0_i32_1 = arith.constant 0 : i32
    return %c0_i32, %c0_i32_0 : i32, i32
  }
  func.func @transform_4(%arg0: i32) -> (i32, i32) {
    %c0_i32 = arith.constant 0 : i32
    %c0_i32_0 = arith.constant 0 : i32
    return %arg0, %c0_i32 : i32, i32
  }
  func.func @transform_5(%arg0: i32) -> (i32, i32) {
    %c0_i32 = arith.constant 0 : i32
    %c0_i32_0 = arith.constant 0 : i32
    return %arg0, %c0_i32 : i32, i32
  }
}

</mosaic_0001>

<llo_original>
// kernel: tpu_custom_call.1
$region0: #{tpu_custom_call.1}
  #allocation0 [shape = 'u32[]', space=smem, size = 0x4, offset = 0x4, fixed_abs, tag = 'smem constant byte address 0x4 - core index']
  #allocation1 [shape = 'u32[144,128]{1,0:T(1,128)}', space=vmem, size = 0x12000, scoped, tag = 'internal scratch']
  %s0 = inlined_call_operand.hbm [shape: bf16[1024,128], index: 0, kind: input, shape index: {}]
  %s1 = inlined_call_operand.vmem [shape: bf16[128,128], index: 1, kind: input, shape index: {}]
  %s2 = inlined_call_operand.hbm [shape: f32[8,128], index: 2, kind: input, shape index: {}]
  %s3 = inlined_call_operand.hbm [shape: bf16[128,128], index: 3, kind: input, shape index: {}]
  %s4 = inlined_call_operand.vmem [shape: s32[64,1], index: 4, kind: input, shape index: {}]
  %s5 = inlined_call_operand.hbm [shape: f32[16,128], index: 5, kind: output, shape index: {}]
  %s6 = sld [smem:[#allocation0]]
  $region65: #{tpu_custom_call.1} parent=0
    _
  %s8 = ssub.s32 1, %s6
  %s9 = scalar_select 0, %s8, %s6
  $region1: #{tpu_custom_call.1} parent=0
    #allocation2 [shape = 'u8[262144]{0}', space=vmem, size = 0x40000, scoped, tag = 'input window, operand 0']
    #allocation3 [shape = 's32[2]{0}', space=sflag, size = 0x8, scoped, tag = 'scoped memory for tpu_custom_call.1']
    #allocation4 [shape = 's32[2]{0}', space=sflag, size = 0x8, scoped, tag = 'scoped memory for tpu_custom_call.1']
    #allocation5 [shape = 'u8[4096]{0}', space=vmem, size = 0x1000, scoped, tag = 'input window, operand 2, single buffered']
    #allocation6 [shape = 's32[1]{0}', space=sflag, size = 0x4, scoped, tag = 'scoped memory for tpu_custom_call.1']
    #allocation7 [shape = 'u8[32768]{0}', space=vmem, size = 0x8000, scoped, tag = 'input window, operand 3, single buffered']
    #allocation8 [shape = 'u8[8192]{0}', space=vmem, size = 0x2000, scoped, tag = 'output window, operand 0']
    %10 = vsyncpa [#allocation3], 0
    %s11 = scalar_lea.sflag [#allocation3], 1
    %12 = vsyncpa %s11, 0
    %13 = vsyncpa [#allocation6], 0
    %14 = vsyncpa [#allocation4], 0
    %s15 = scalar_lea.sflag [#allocation4], 1
    %16 = vsyncpa %s15, 0
    loop: start=0, step=1, limit=4
    $region2: #{tpu_custom_call.1} parent=1 // loop_pre_header
      _
    $region3: #{tpu_custom_call.1} parent=1 // loop_header
      %s18 = sphi 0, %s22
      %p19 = scmp.ge.s32.totalorder %s18, 4
      %s28 = sphi 0, %s30
      %s31 = sphi 0, %s28
      %s32 = sphi 0, %s31
      %s48 = sphi 0, %s32
      %s52 = sphi 0, %s52
      %s54 = sphi 0, %s52
      %s55 = sphi 0, %s54
      %s69 = sphi 0, %s55
      %s73 = sphi 0, %s73
      %s75 = sphi 0, %s73
      %s76 = sphi 0, %s75
      %s90 = sphi 0, %s76
      %s94 = sphi 0, %s94
      %s96 = sphi 0, %s94
      %s97 = sphi 0, %s96
      %s111 = sphi 0, %s97
      %s117 = sphi 0, %s119
      %s120 = sphi 0, %s117
      %s121 = sphi 0, %s120
      %s137 = sphi 0, %s121
      %s143 = sphi 0, %s145
      %s146 = sphi 0, %s143
      %s147 = sphi 0, %s146
      %s163 = sphi 0, %s147
    $region4: #{tpu_custom_call.1} parent=1 // loop_header_branch
      %21 = sbr.rel (%p19) target = $region8
    $region5: #{tpu_custom_call.1} parent=1 // loop_body
      %s23 = ssub.s32 %s18, 1
      %s24 = ssub.s32 %s18, 2
      %s25 = sadd.s32 %s18, 1
      %s26 = ssub.s32 %s18, %s25
      %p27 = scmp.eq.s32.totalorder %s26, 0
      %s29 = sadd.s32 %s28, 1
      %s30 = scalar_select %p27, %s28, %s29
      %p33 = pneg %p27
      %p34 = scmp.eq.s32.totalorder %s18, 1
      %p35 = por %p33, %p34
      %p36 = scmp.ne.s32.totalorder %s28, %s31
      %p37 = scmp.eq.s32.totalorder %s18, 0
      %p38 = por %p36, %p37
      %p39 = scmp.ne.s32.totalorder %s28, %s31
      %p40 = scmp.eq.s32.totalorder %s23, 1
      %p41 = por %p39, %p40
      %p42 = scmp.ne.s32.totalorder %s31, %s32
      %p43 = scmp.eq.s32.totalorder %s23, 0
      %p44 = por %p42, %p43
      %p45 = scmp.ne.s32.totalorder %s31, %s32
      %p46 = scmp.eq.s32.totalorder %s24, 1
      %p47 = por %p45, %p46
      %p49 = scmp.ne.s32.totalorder %s32, %s48
      %p50 = scmp.eq.s32.totalorder %s24, 0
      %p51 = por %p49, %p50
      %s53 = sadd.s32 %s52, 1
      %p56 = scmp.eq.s32.totalorder %s18, 1
      %p57 = scmp.ne.s32.totalorder %s52, %s54
      %p58 = scmp.eq.s32.totalorder %s18, 0
      %p59 = por %p57, %p58
      %p60 = scmp.ne.s32.totalorder %s52, %s54
      %p61 = scmp.eq.s32.totalorder %s23, 1
      %p62 = por %p60, %p61
      %p63 = scmp.ne.s32.totalorder %s54, %s55
      %p64 = scmp.eq.s32.totalorder %s23, 0
      %p65 = por %p63, %p64
      %p66 = scmp.ne.s32.totalorder %s54, %s55
      %p67 = scmp.eq.s32.totalorder %s24, 1
      %p68 = por %p66, %p67
      %p70 = scmp.ne.s32.totalorder %s55, %s69
      %p71 = scmp.eq.s32.totalorder %s24, 0
      %p72 = por %p70, %p71
      %s74 = sadd.s32 %s73, 1
      %p77 = scmp.eq.s32.totalorder %s18, 1
      %p78 = scmp.ne.s32.totalorder %s73, %s75
      %p79 = scmp.eq.s32.totalorder %s18, 0
      %p80 = por %p78, %p79
      %p81 = scmp.ne.s32.totalorder %s73, %s75
      %p82 = scmp.eq.s32.totalorder %s23, 1
      %p83 = por %p81, %p82
      %p84 = scmp.ne.s32.totalorder %s75, %s76
      %p85 = scmp.eq.s32.totalorder %s23, 0
      %p86 = por %p84, %p85
      %p87 = scmp.ne.s32.totalorder %s75, %s76
      %p88 = scmp.eq.s32.totalorder %s24, 1
      %p89 = por %p87, %p88
      %p91 = scmp.ne.s32.totalorder %s76, %s90
      %p92 = scmp.eq.s32.totalorder %s24, 0
      %p93 = por %p91, %p92
      %s95 = sadd.s32 %s94, 1
      %p98 = scmp.eq.s32.totalorder %s18, 1
      %p99 = scmp.ne.s32.totalorder %s94, %s96
      %p100 = scmp.eq.s32.totalorder %s18, 0
      %p101 = por %p99, %p100
      %p102 = scmp.ne.s32.totalorder %s94, %s96
      %p103 = scmp.eq.s32.totalorder %s23, 1
      %p104 = por %p102, %p103
      %p105 = scmp.ne.s32.totalorder %s96, %s97
      %p106 = scmp.eq.s32.totalorder %s23, 0
      %p107 = por %p105, %p106
      %p108 = scmp.ne.s32.totalorder %s96, %s97
      %p109 = scmp.eq.s32.totalorder %s24, 1
      %p110 = por %p108, %p109
      %p112 = scmp.ne.s32.totalorder %s97, %s111
      %p113 = scmp.eq.s32.totalorder %s24, 0
      %p114 = por %p112, %p113
      %s115 = ssub.s32 %s18, %s25
      %p116 = scmp.eq.s32.totalorder %s115, 0
      %s118 = sadd.s32 %s117, 1
      %s119 = scalar_select %p116, %s117, %s118
      %p122 = pneg %p116
      %p123 = scmp.eq.s32.totalorder %s18, 1
      %p124 = por %p122, %p123
      %p125 = scmp.ne.s32.totalorder %s117, %s120
      %p126 = scmp.eq.s32.totalorder %s18, 0
      %p127 = por %p125, %p126
      %p128 = scmp.ne.s32.totalorder %s117, %s120
      %p129 = scmp.eq.s32.totalorder %s23, 1
      %p130 = por %p128, %p129
      %p131 = scmp.ne.s32.totalorder %s120, %s121
      %p132 = scmp.eq.s32.totalorder %s23, 0
      %p133 = por %p131, %p132
      %p134 = scmp.ne.s32.totalorder %s120, %s121
      %p135 = scmp.eq.s32.totalorder %s24, 1
      %p136 = por %p134, %p135
      %p138 = scmp.ne.s32.totalorder %s121, %s137
      %p139 = scmp.eq.s32.totalorder %s24, 0
      %p140 = por %p138, %p139
      %s141 = ssub.s32 %s18, %s25
      %p142 = scmp.eq.s32.totalorder %s141, 0
      %s144 = sadd.s32 %s143, 1
      %s145 = scalar_select %p142, %s143, %s144
      %p148 = pneg %p142
      %p149 = scmp.eq.s32.totalorder %s18, 1
      %p150 = por %p148, %p149
      %p151 = scmp.ne.s32.totalorder %s143, %s146
      %p152 = scmp.eq.s32.totalorder %s18, 0
      %p153 = por %p151, %p152
      %p154 = scmp.ne.s32.totalorder %s143, %s146
      %p155 = scmp.eq.s32.totalorder %s23, 1
      %p156 = por %p154, %p155
      %p157 = scmp.ne.s32.totalorder %s146, %s147
      %p158 = scmp.eq.s32.totalorder %s23, 0
      %p159 = por %p157, %p158
      %p160 = scmp.ne.s32.totalorder %s146, %s147
      %p161 = scmp.eq.s32.totalorder %s24, 1
      %p162 = por %p160, %p161
      %p164 = scmp.ne.s32.totalorder %s147, %s163
      %p165 = scmp.eq.s32.totalorder %s24, 0
      %p166 = por %p164, %p165
      %p167 = scmp.le.s32.totalorder 1, %s18
      %p168 = scmp.lt.s32.totalorder %s18, 3
      %p169 = pnand %p167, %p168
      %p170 = pneg %p169
      // Predicated region
      $region9: #{tpu_custom_call.1} parent=5 // pred_check
        _
      $region10: #{tpu_custom_call.1} parent=5 // pred_check_branch
        %172 = sbr.rel (%p169) target = $region12
      $region11: #{tpu_custom_call.1} parent=5 // pred_region
        %s173 = ssub.s32 %s18, 1
        // Predicated region
        $region13: #{tpu_custom_call.1} parent=11 // pred_check
          %p174 = pneg %p65
        $region14: #{tpu_custom_call.1} parent=11 // pred_check_branch
          %176 = sbr.rel (%p174) target = $region16
        $region15: #{tpu_custom_call.1} parent=11 // pred_region
          _
        $region16: #{tpu_custom_call.1} parent=11 // pred_fallthru
          _
        // Predicated region
        $region17: #{tpu_custom_call.1} parent=11 // pred_check
          %p177 = pneg %p86
        $region18: #{tpu_custom_call.1} parent=11 // pred_check_branch
          %179 = sbr.rel (%p177) target = $region20
        $region19: #{tpu_custom_call.1} parent=11 // pred_region
          %s181 = ssub.s32 128, 128
          %182 = vsyncadd [#allocation6], %s181
          %s184 = sshll.u32 [#allocation5], 4
          %s185 = int_to_ptr.vmem [resolvable:$true] %s184
          %187 = dma.hbm_to_vmem [thread:$0]  %s2, 128, %s185, [#allocation6]
        $region20: #{tpu_custom_call.1} parent=11 // pred_fallthru
          _
        // Predicated region
        $region21: #{tpu_custom_call.1} parent=11 // pred_check
          %p188 = pneg %p107
        $region22: #{tpu_custom_call.1} parent=11 // pred_check_branch
          %190 = sbr.rel (%p188) target = $region24
        $region23: #{tpu_custom_call.1} parent=11 // pred_region
          %s192 = ssub.s32 1024, 1024
          %193 = vsyncadd [#allocation6], %s192
          %s194 = sshll.u32 [#allocation7], 4
          %s195 = int_to_ptr.vmem [resolvable:$true] %s194
          %200 = dma.hbm_to_vmem [thread:$0]  %s3, 1024, %s195, [#allocation6], 64, 64, 4
        $region24: #{tpu_custom_call.1} parent=11 // pred_fallthru
          _
      $region12: #{tpu_custom_call.1} parent=5 // pred_fallthru
        _
      %p201 = scmp.lt.s32.totalorder %s18, 2
      // Predicated region
      $region25: #{tpu_custom_call.1} parent=5 // pred_check
        %p202 = pneg %p201
      $region26: #{tpu_custom_call.1} parent=5 // pred_check_branch
        %204 = sbr.rel (%p202) target = $region28
      $region27: #{tpu_custom_call.1} parent=5 // pred_region
        // Predicated region
        $region29: #{tpu_custom_call.1} parent=27 // pred_check
          %p205 = pneg %p38
        $region30: #{tpu_custom_call.1} parent=27 // pred_check_branch
          %207 = sbr.rel (%p205) target = $region32
        $region31: #{tpu_custom_call.1} parent=27 // pred_region
          %s208 = sand.u32 %s28, 1
          %s209 = scalar_lea.sflag [#allocation3], %s208
          %s210 = sand.u32 %s28, 1
          %s211 = smul.addr %s210, 256
          %s212 = scalar_lea.vmem [#allocation2], %s211
          %s213 = smul.u32 64, %s18
          %s215 = ssub.s32 4096, 4096
          %216 = vsyncadd %s209, %s215
          %s217 = smul.addr %s213, 64
          %s218 = scalar_lea.hbm %s0, %s217
          %s219 = sshll.u32 %s212, 4
          %s220 = int_to_ptr.vmem [resolvable:$true] %s219
          %225 = dma.hbm_to_vmem [thread:$0]  %s218, 4096, %s220, %s209, 64, 64, 4
        $region32: #{tpu_custom_call.1} parent=27 // pred_fallthru
          _
        // Predicated region
        $region33: #{tpu_custom_call.1} parent=27 // pred_check
          %p226 = pneg %p127
        $region34: #{tpu_custom_call.1} parent=27 // pred_check_branch
          %228 = sbr.rel (%p226) target = $region36
        $region35: #{tpu_custom_call.1} parent=27 // pred_region
          %s229 = smul.u32 4, %s18
          %p230 = scmp.lt.s32.totalorder %s229, 7
          %s231 = scalar_select %p230, %s229, 7
          %s232 = smul.addr %s231, 8
          %s233 = scalar_lea.vmem %s4, %s232
          %s234 = smul.u32 4, %s18
        $region36: #{tpu_custom_call.1} parent=27 // pred_fallthru
          _
      $region28: #{tpu_custom_call.1} parent=5 // pred_fallthru
        _
      %p235 = scmp.le.s32.totalorder 1, %s18
      %p236 = scmp.lt.s32.totalorder %s18, 3
      %p237 = pnand %p235, %p236
      %p238 = pneg %p237
      // Predicated region
      $region37: #{tpu_custom_call.1} parent=5 // pred_check
        _
      $region38: #{tpu_custom_call.1} parent=5 // pred_check_branch
        %240 = sbr.rel (%p237) target = $region40
      $region39: #{tpu_custom_call.1} parent=5 // pred_region
        %s241 = ssub.s32 %s18, 1
        %s242 = sand.u32 %s31, 1
        %s243 = scalar_lea.sflag [#allocation3], %s242
        %s244 = sand.u32 %s31, 1
        %s245 = smul.addr %s244, 256
        %s246 = scalar_lea.vmem [#allocation2], %s245
        // Predicated region
        $region41: #{tpu_custom_call.1} parent=39 // pred_check
          %p247 = pneg %p44
        $region42: #{tpu_custom_call.1} parent=39 // pred_check_branch
          %249 = sbr.rel (%p247) target = $region44
        $region43: #{tpu_custom_call.1} parent=39 // pred_region
          %250 = dma.done %s243, 4096
        $region44: #{tpu_custom_call.1} parent=39 // pred_fallthru
          _
        // Predicated region
        $region45: #{tpu_custom_call.1} parent=39 // pred_check
          %p251 = pneg %p86
        $region46: #{tpu_custom_call.1} parent=39 // pred_check_branch
          %253 = sbr.rel (%p251) target = $region48
        $region47: #{tpu_custom_call.1} parent=39 // pred_region
          %254 = dma.done [#allocation6], 128
        $region48: #{tpu_custom_call.1} parent=39 // pred_fallthru
          _
        // Predicated region
        $region49: #{tpu_custom_call.1} parent=39 // pred_check
          %p255 = pneg %p107
        $region50: #{tpu_custom_call.1} parent=39 // pred_check_branch
          %257 = sbr.rel (%p255) target = $region52
        $region51: #{tpu_custom_call.1} parent=39 // pred_region
          %258 = dma.done [#allocation6], 1024
        $region52: #{tpu_custom_call.1} parent=39 // pred_fallthru
          _
        %s259 = sand.u32 %s31, 1
        %s260 = scalar_lea.sflag [#allocation3], %s259
        %s261 = sand.u32 %s31, 1
        %s262 = smul.addr %s261, 256
        %s263 = scalar_lea.vmem [#allocation2], %s262
        %p264 = pneg %p44
        %p265 = pneg %p41
        %p266 = pneg %p65
        %p267 = pneg %p62
        %p268 = pneg %p86
        %p269 = pneg %p83
        %p270 = pneg %p107
        %p271 = pneg %p104
        %s272 = smul.u32 4, %s23
        %p273 = scmp.lt.s32.totalorder %s272, 7
        %s274 = scalar_select %p273, %s272, 7
        %s275 = smul.addr %s274, 8
        %s276 = scalar_lea.vmem %s4, %s275
        %p277 = pneg %p133
        %p278 = pneg %p130
        %p279 = pneg %p159
        %p280 = pneg %p156
        %s281 = sand.u32 %s146, 1
        %s282 = scalar_lea.sflag [#allocation4], %s281
        %s283 = sand.u32 %s146, 1
        %s284 = smul.addr %s283, 8
        %s285 = scalar_lea.vmem [#allocation8], %s284
        %s286 = smul.u32 64, %s23
        %s287 = smul.u32 4, %s23
        %p288 = scmp.lt.s32.totalorder %s287, 7
        %s289 = scalar_select %p288, %s287, 7
        %s290 = smul.addr %s289, 8
        %s291 = scalar_lea.vmem %s4, %s290
        %s292 = smul.u32 4, %s23
        %v294 = vld [vmem:[%s246] sm:$0xf]
        %v295 = vld [vmem:[%s246 + $0x4] sm:$0xf]
        %v296 = vld [vmem:[%s246 + $0x8] sm:$0xf]
        %v297 = vld [vmem:[%s246 + $0xc] sm:$0xf]
        %v298 = vld [vmem:[%s246 + $0x10] sm:$0xf]
        %v299 = vld [vmem:[%s246 + $0x14] sm:$0xf]
        %v300 = vld [vmem:[%s246 + $0x18] sm:$0xf]
        %v301 = vld [vmem:[%s246 + $0x1c] sm:$0xf]
        %v302 = vld [vmem:[%s246 + $0x20] sm:$0xf]
        %v303 = vld [vmem:[%s246 + $0x24] sm:$0xf]
        %v304 = vld [vmem:[%s246 + $0x28] sm:$0xf]
        %v305 = vld [vmem:[%s246 + $0x2c] sm:$0xf]
        %v306 = vld [vmem:[%s246 + $0x30] sm:$0xf]
        %v307 = vld [vmem:[%s246 + $0x34] sm:$0xf]
        %v308 = vld [vmem:[%s246 + $0x38] sm:$0xf]
        %v309 = vld [vmem:[%s246 + $0x3c] sm:$0xf]
        %v310 = vld [vmem:[%s246 + $0x40] sm:$0xf]
        %v311 = vld [vmem:[%s246 + $0x44] sm:$0xf]
        %v312 = vld [vmem:[%s246 + $0x48] sm:$0xf]
        %v313 = vld [vmem:[%s246 + $0x4c] sm:$0xf]
        %v314 = vld [vmem:[%s246 + $0x50] sm:$0xf]
        %v315 = vld [vmem:[%s246 + $0x54] sm:$0xf]
        %v316 = vld [vmem:[%s246 + $0x58] sm:$0xf]
        %v317 = vld [vmem:[%s246 + $0x5c] sm:$0xf]
        %v318 = vld [vmem:[%s246 + $0x60] sm:$0xf]
        %v319 = vld [vmem:[%s246 + $0x64] sm:$0xf]
        %v320 = vld [vmem:[%s246 + $0x68] sm:$0xf]
        %v321 = vld [vmem:[%s246 + $0x6c] sm:$0xf]
        %v322 = vld [vmem:[%s246 + $0x70] sm:$0xf]
        %v323 = vld [vmem:[%s246 + $0x74] sm:$0xf]
        %v324 = vld [vmem:[%s246 + $0x78] sm:$0xf]
        %v325 = vld [vmem:[%s246 + $0x7c] sm:$0xf]
        %v326 = vld [vmem:[%s246 + $0x80] sm:$0xf]
        %v327 = vld [vmem:[%s246 + $0x84] sm:$0xf]
        %v328 = vld [vmem:[%s246 + $0x88] sm:$0xf]
        %v329 = vld [vmem:[%s246 + $0x8c] sm:$0xf]
        %v330 = vld [vmem:[%s246 + $0x90] sm:$0xf]
        %v331 = vld [vmem:[%s246 + $0x94] sm:$0xf]
        %v332 = vld [vmem:[%s246 + $0x98] sm:$0xf]
        %v333 = vld [vmem:[%s246 + $0x9c] sm:$0xf]
        %v334 = vld [vmem:[%s246 + $0xa0] sm:$0xf]
        %v335 = vld [vmem:[%s246 + $0xa4] sm:$0xf]
        %v336 = vld [vmem:[%s246 + $0xa8] sm:$0xf]
        %v337 = vld [vmem:[%s246 + $0xac] sm:$0xf]
        %v338 = vld [vmem:[%s246 + $0xb0] sm:$0xf]
        %v339 = vld [vmem:[%s246 + $0xb4] sm:$0xf]
        %v340 = vld [vmem:[%s246 + $0xb8] sm:$0xf]
        %v341 = vld [vmem:[%s246 + $0xbc] sm:$0xf]
        %v342 = vld [vmem:[%s246 + $0xc0] sm:$0xf]
        %v343 = vld [vmem:[%s246 + $0xc4] sm:$0xf]
        %v344 = vld [vmem:[%s246 + $0xc8] sm:$0xf]
        %v345 = vld [vmem:[%s246 + $0xcc] sm:$0xf]
        %v346 = vld [vmem:[%s246 + $0xd0] sm:$0xf]
        %v347 = vld [vmem:[%s246 + $0xd4] sm:$0xf]
        %v348 = vld [vmem:[%s246 + $0xd8] sm:$0xf]
        %v349 = vld [vmem:[%s246 + $0xdc] sm:$0xf]
        %v350 = vld [vmem:[%s246 + $0xe0] sm:$0xf]
        %v351 = vld [vmem:[%s246 + $0xe4] sm:$0xf]
        %v352 = vld [vmem:[%s246 + $0xe8] sm:$0xf]
        %v353 = vld [vmem:[%s246 + $0xec] sm:$0xf]
        %v354 = vld [vmem:[%s246 + $0xf0] sm:$0xf]
        %v355 = vld [vmem:[%s246 + $0xf4] sm:$0xf]
        %v356 = vld [vmem:[%s246 + $0xf8] sm:$0xf]
        %v357 = vld [vmem:[%s246 + $0xfc] sm:$0xf]
        %v358 = vld [vmem:[%s1] sm:$0xf]
        %v359 = vld [vmem:[%s1 + $0x4] sm:$0xf]
        %v360 = vld [vmem:[%s1 + $0x8] sm:$0xf]
        %v361 = vld [vmem:[%s1 + $0xc] sm:$0xf]
        %v362 = vld [vmem:[%s1 + $0x10] sm:$0xf]
        %v363 = vld [vmem:[%s1 + $0x14] sm:$0xf]
        %v364 = vld [vmem:[%s1 + $0x18] sm:$0xf]
        %v365 = vld [vmem:[%s1 + $0x1c] sm:$0xf]
        %v366 = vld [vmem:[%s1 + $0x20] sm:$0xf]
        %v367 = vld [vmem:[%s1 + $0x24] sm:$0xf]
        %v368 = vld [vmem:[%s1 + $0x28] sm:$0xf]
        %v369 = vld [vmem:[%s1 + $0x2c] sm:$0xf]
        %v370 = vld [vmem:[%s1 + $0x30] sm:$0xf]
        %v371 = vld [vmem:[%s1 + $0x34] sm:$0xf]
        %v372 = vld [vmem:[%s1 + $0x38] sm:$0xf]
        %v373 = vld [vmem:[%s1 + $0x3c] sm:$0xf]
        %v438 = vunpack.c.l.b16 %v294
        %v439 = vunpack.c.l.b16 %v295
        %v440 = vunpack.c.l.b16 %v296
        %v441 = vunpack.c.l.b16 %v297
        %v442 = vunpack.c.l.b16 %v298
        %v443 = vunpack.c.l.b16 %v299
        %v444 = vunpack.c.l.b16 %v300
        %v445 = vunpack.c.l.b16 %v301
        %v446 = vunpack.c.l.b16 %v302
        %v447 = vunpack.c.l.b16 %v303
        %v448 = vunpack.c.l.b16 %v304
        %v449 = vunpack.c.l.b16 %v305
        %v450 = vunpack.c.l.b16 %v306
        %v451 = vunpack.c.l.b16 %v307
        %v452 = vunpack.c.l.b16 %v308
        %v453 = vunpack.c.l.b16 %v309
        %v454 = vunpack.c.l.b16 %v310
        %v455 = vunpack.c.l.b16 %v311
        %v456 = vunpack.c.l.b16 %v312
        %v457 = vunpack.c.l.b16 %v313
        %v458 = vunpack.c.l.b16 %v314
        %v459 = vunpack.c.l.b16 %v315
        %v460 = vunpack.c.l.b16 %v316
        %v461 = vunpack.c.l.b16 %v317
        %v462 = vunpack.c.l.b16 %v318
        %v463 = vunpack.c.l.b16 %v319
        %v464 = vunpack.c.l.b16 %v320
        %v465 = vunpack.c.l.b16 %v321
        %v466 = vunpack.c.l.b16 %v322
        %v467 = vunpack.c.l.b16 %v323
        %v468 = vunpack.c.l.b16 %v324
        %v469 = vunpack.c.l.b16 %v325
        %v470 = vunpack.c.l.b16 %v326
        %v471 = vunpack.c.l.b16 %v327
        %v472 = vunpack.c.l.b16 %v328
        %v473 = vunpack.c.l.b16 %v329
        %v474 = vunpack.c.l.b16 %v330
        %v475 = vunpack.c.l.b16 %v331
        %v476 = vunpack.c.l.b16 %v332
        %v477 = vunpack.c.l.b16 %v333
        %v478 = vunpack.c.l.b16 %v334
        %v479 = vunpack.c.l.b16 %v335
        %v480 = vunpack.c.l.b16 %v336
        %v481 = vunpack.c.l.b16 %v337
        %v482 = vunpack.c.l.b16 %v338
        %v483 = vunpack.c.l.b16 %v339
        %v484 = vunpack.c.l.b16 %v340
        %v485 = vunpack.c.l.b16 %v341
        %v486 = vunpack.c.l.b16 %v342
        %v487 = vunpack.c.l.b16 %v343
        %v488 = vunpack.c.l.b16 %v344
        %v489 = vunpack.c.l.b16 %v345
        %v490 = vunpack.c.l.b16 %v346
        %v491 = vunpack.c.l.b16 %v347
        %v492 = vunpack.c.l.b16 %v348
        %v493 = vunpack.c.l.b16 %v349
        %v494 = vunpack.c.l.b16 %v350
        %v495 = vunpack.c.l.b16 %v351
        %v496 = vunpack.c.l.b16 %v352
        %v497 = vunpack.c.l.b16 %v353
        %v498 = vunpack.c.l.b16 %v354
        %v499 = vunpack.c.l.b16 %v355
        %v500 = vunpack.c.l.b16 %v356
        %v501 = vunpack.c.l.b16 %v357
        %v502 = vpack.c.b16 %v439, %v438
        %v503 = vpack.c.b16 %v441, %v440
        %v504 = vpack.c.b16 %v443, %v442
        %v505 = vpack.c.b16 %v445, %v444
        %v506 = vpack.c.b16 %v447, %v446
        %v507 = vpack.c.b16 %v449, %v448
        %v508 = vpack.c.b16 %v451, %v450
        %v509 = vpack.c.b16 %v453, %v452
        %v510 = vpack.c.b16 %v455, %v454
        %v511 = vpack.c.b16 %v457, %v456
        %v512 = vpack.c.b16 %v459, %v458
        %v513 = vpack.c.b16 %v461, %v460
        %v514 = vpack.c.b16 %v463, %v462
        %v515 = vpack.c.b16 %v465, %v464
        %v516 = vpack.c.b16 %v467, %v466
        %v517 = vpack.c.b16 %v469, %v468
        %v518 = vpack.c.b16 %v471, %v470
        %v519 = vpack.c.b16 %v473, %v472
        %v520 = vpack.c.b16 %v475, %v474
        %v521 = vpack.c.b16 %v477, %v476
        %v522 = vpack.c.b16 %v479, %v478
        %v523 = vpack.c.b16 %v481, %v480
        %v524 = vpack.c.b16 %v483, %v482
        %v525 = vpack.c.b16 %v485, %v484
        %v526 = vpack.c.b16 %v487, %v486
        %v527 = vpack.c.b16 %v489, %v488
        %v528 = vpack.c.b16 %v491, %v490
        %v529 = vpack.c.b16 %v493, %v492
        %v530 = vpack.c.b16 %v495, %v494
        %v531 = vpack.c.b16 %v497, %v496
        %v532 = vpack.c.b16 %v499, %v498
        %v533 = vpack.c.b16 %v501, %v500
        %v582 = vunpack.c.l.b16 %v358
        %v583 = vunpack.c.l.b16 %v359
        %v584 = vunpack.c.l.b16 %v360
        %v585 = vunpack.c.l.b16 %v361
        %v586 = vunpack.c.l.b16 %v362
        %v587 = vunpack.c.l.b16 %v363
        %v588 = vunpack.c.l.b16 %v364
        %v589 = vunpack.c.l.b16 %v365
        %v590 = vunpack.c.l.b16 %v366
        %v591 = vunpack.c.l.b16 %v367
        %v592 = vunpack.c.l.b16 %v368
        %v593 = vunpack.c.l.b16 %v369
        %v594 = vunpack.c.l.b16 %v370
        %v595 = vunpack.c.l.b16 %v371
        %v596 = vunpack.c.l.b16 %v372
        %v597 = vunpack.c.l.b16 %v373
        %v598 = vpack.c.b16 %v583, %v582
        %v599 = vpack.c.b16 %v585, %v584
        %v600 = vpack.c.b16 %v587, %v586
        %v601 = vpack.c.b16 %v589, %v588
        %v602 = vpack.c.b16 %v591, %v590
        %v603 = vpack.c.b16 %v593, %v592
        %v604 = vpack.c.b16 %v595, %v594
        %v605 = vpack.c.b16 %v597, %v596
        %614 = vmatprep.subr.bf16.mxu0 0
        %615 = vmatpush1.bf16.msra.mxu0 %v605
        %616 = vmatprep.subr.bf16.mxu0 0
        %617 = vmatpush1.bf16.msra.mxu0 %v604
        %618 = vmatprep.subr.bf16.mxu0 0
        %619 = vmatpush1.bf16.msra.mxu0 %v603
        %620 = vmatprep.subr.bf16.mxu0 0
        %621 = vmatpush1.bf16.msra.mxu0 %v602
        %622 = vmatprep.subr.bf16.mxu0 0
        %623 = vmatpush1.bf16.msra.mxu0 %v601
        %624 = vmatprep.subr.bf16.mxu0 0
        %625 = vmatpush1.bf16.msra.mxu0 %v600
        %626 = vmatprep.subr.bf16.mxu0 0
        %627 = vmatpush1.bf16.msra.mxu0 %v599
        %628 = vmatprep.subr.bf16.mxu0 0
        %629 = vmatpush1.bf16.msra.mxu0 %v598
        %630 = vmatprep.subr.bf16.mxu0 0
        %631 = vmatpush2.bf16.msra.mxu0 0
        %632 = vmatprep.subr.bf16.mxu0 0
        %633 = vmatpush2.bf16.msra.mxu0 0
        %634 = vmatprep.subr.bf16.mxu0 0
        %635 = vmatpush2.bf16.msra.mxu0 0
        %636 = vmatprep.subr.bf16.mxu0 0
        %637 = vmatpush2.bf16.msra.mxu0 0
        %638 = vmatprep.subr.bf16.mxu0 0
        %639 = vmatpush2.bf16.msra.mxu0 0
        %640 = vmatprep.subr.bf16.mxu0 0
        %641 = vmatpush2.bf16.msra.mxu0 0
        %642 = vmatprep.subr.bf16.mxu0 0
        %643 = vmatpush2.bf16.msra.mxu0 0
        %644 = vmatprep.subr.bf16.mxu0 0
        %645 = vmatpush2.bf16.msra.mxu0 0
        %646 = vmatprep.mubr.bf16.mxu0 0
        %647 = vmatmul.mubr.bf16.gmra.mxu0 %v502
        %v648 = vpop.f32.mrf.mxu0
        %v649 = vadd.f32 0.0, %v648
        %v650 = vpop.f32.mrf.mxu0
        %v651 = vpop.f32.mrf.mxu0
        %v652 = vadd.f32 0.0, %v651
        %v653 = vpop.f32.mrf.mxu0
        %654 = vmatprep.mubr.bf16.mxu0 0
        %655 = vmatmul.mubr.bf16.gmra.mxu0 %v503
        %v656 = vpop.f32.mrf.mxu0
        %v657 = vadd.f32 0.0, %v656
        %v658 = vpop.f32.mrf.mxu0
        %v659 = vpop.f32.mrf.mxu0
        %v660 = vadd.f32 0.0, %v659
        %v661 = vpop.f32.mrf.mxu0
        %662 = vmatprep.mubr.bf16.mxu0 0
        %663 = vmatmul.mubr.bf16.gmra.mxu0 %v504
        %v664 = vpop.f32.mrf.mxu0
        %v665 = vadd.f32 0.0, %v664
        %v666 = vpop.f32.mrf.mxu0
        %v667 = vpop.f32.mrf.mxu0
        %v668 = vadd.f32 0.0, %v667
        %v669 = vpop.f32.mrf.mxu0
        %670 = vmatprep.mubr.bf16.mxu0 0
        %671 = vmatmul.mubr.bf16.gmra.mxu0 %v505
        %v672 = vpop.f32.mrf.mxu0
        %v673 = vadd.f32 0.0, %v672
        %v674 = vpop.f32.mrf.mxu0
        %v675 = vpop.f32.mrf.mxu0
        %v676 = vadd.f32 0.0, %v675
        %v677 = vpop.f32.mrf.mxu0
        %678 = vmatprep.mubr.bf16.mxu0 0
        %679 = vmatmul.mubr.bf16.gmra.mxu0 %v506
        %v680 = vpop.f32.mrf.mxu0
        %v681 = vadd.f32 0.0, %v680
        %v682 = vpop.f32.mrf.mxu0
        %v683 = vpop.f32.mrf.mxu0
        %v684 = vadd.f32 0.0, %v683
        %v685 = vpop.f32.mrf.mxu0
        %686 = vmatprep.mubr.bf16.mxu0 0
        %687 = vmatmul.mubr.bf16.gmra.mxu0 %v507
        %v688 = vpop.f32.mrf.mxu0
        %v689 = vadd.f32 0.0, %v688
        %v690 = vpop.f32.mrf.mxu0
        %v691 = vpop.f32.mrf.mxu0
        %v692 = vadd.f32 0.0, %v691
        %v693 = vpop.f32.mrf.mxu0
        %694 = vmatprep.mubr.bf16.mxu0 0
        %695 = vmatmul.mubr.bf16.gmra.mxu0 %v508
        %v696 = vpop.f32.mrf.mxu0
        %v697 = vadd.f32 0.0, %v696
        %v698 = vpop.f32.mrf.mxu0
        %v699 = vpop.f32.mrf.mxu0
        %v700 = vadd.f32 0.0, %v699
        %v701 = vpop.f32.mrf.mxu0
        %702 = vmatprep.mubr.bf16.mxu0 0
        %703 = vmatmul.mubr.bf16.gmra.mxu0 %v509
        %v704 = vpop.f32.mrf.mxu0
        %v705 = vadd.f32 0.0, %v704
        %v706 = vpop.f32.mrf.mxu0
        %v707 = vpop.f32.mrf.mxu0
        %v708 = vadd.f32 0.0, %v707
        %v709 = vpop.f32.mrf.mxu0
        %710 = vmatprep.mubr.bf16.mxu0 0
        %711 = vmatmul.mubr.bf16.gmra.mxu0 %v510
        %v712 = vpop.f32.mrf.mxu0
        %v713 = vadd.f32 0.0, %v712
        %v714 = vpop.f32.mrf.mxu0
        %v715 = vpop.f32.mrf.mxu0
        %v716 = vadd.f32 0.0, %v715
        %v717 = vpop.f32.mrf.mxu0
        %718 = vmatprep.mubr.bf16.mxu0 0
        %719 = vmatmul.mubr.bf16.gmra.mxu0 %v511
        %v720 = vpop.f32.mrf.mxu0
        %v721 = vadd.f32 0.0, %v720
        %v722 = vpop.f32.mrf.mxu0
        %v723 = vpop.f32.mrf.mxu0
        %v724 = vadd.f32 0.0, %v723
        %v725 = vpop.f32.mrf.mxu0
        %726 = vmatprep.mubr.bf16.mxu0 0
        %727 = vmatmul.mubr.bf16.gmra.mxu0 %v512
        %v728 = vpop.f32.mrf.mxu0
        %v729 = vadd.f32 0.0, %v728
        %v730 = vpop.f32.mrf.mxu0
        %v731 = vpop.f32.mrf.mxu0
        %v732 = vadd.f32 0.0, %v731
        %v733 = vpop.f32.mrf.mxu0
        %734 = vmatprep.mubr.bf16.mxu0 0
        %735 = vmatmul.mubr.bf16.gmra.mxu0 %v513
        %v736 = vpop.f32.mrf.mxu0
        %v737 = vadd.f32 0.0, %v736
        %v738 = vpop.f32.mrf.mxu0
        %v739 = vpop.f32.mrf.mxu0
        %v740 = vadd.f32 0.0, %v739
        %v741 = vpop.f32.mrf.mxu0
        %742 = vmatprep.mubr.bf16.mxu0 0
        %743 = vmatmul.mubr.bf16.gmra.mxu0 %v514
        %v744 = vpop.f32.mrf.mxu0
        %v745 = vadd.f32 0.0, %v744
        %v746 = vpop.f32.mrf.mxu0
        %v747 = vpop.f32.mrf.mxu0
        %v748 = vadd.f32 0.0, %v747
        %v749 = vpop.f32.mrf.mxu0
        %750 = vmatprep.mubr.bf16.mxu0 0
        %751 = vmatmul.mubr.bf16.gmra.mxu0 %v515
        %v752 = vpop.f32.mrf.mxu0
        %v753 = vadd.f32 0.0, %v752
        %v754 = vpop.f32.mrf.mxu0
        %v755 = vpop.f32.mrf.mxu0
        %v756 = vadd.f32 0.0, %v755
        %v757 = vpop.f32.mrf.mxu0
        %758 = vmatprep.mubr.bf16.mxu0 0
        %759 = vmatmul.mubr.bf16.gmra.mxu0 %v516
        %v760 = vpop.f32.mrf.mxu0
        %v761 = vadd.f32 0.0, %v760
        %v762 = vpop.f32.mrf.mxu0
        %v763 = vpop.f32.mrf.mxu0
        %v764 = vadd.f32 0.0, %v763
        %v765 = vpop.f32.mrf.mxu0
        %766 = vmatprep.mubr.bf16.mxu0 0
        %767 = vmatmul.mubr.bf16.gmra.mxu0 %v517
        %v768 = vpop.f32.mrf.mxu0
        %v769 = vadd.f32 0.0, %v768
        %v770 = vpop.f32.mrf.mxu0
        %v771 = vpop.f32.mrf.mxu0
        %v772 = vadd.f32 0.0, %v771
        %v773 = vpop.f32.mrf.mxu0
        %774 = vmatprep.mubr.bf16.mxu0 0
        %775 = vmatmul.mubr.bf16.gmra.mxu0 %v518
        %v776 = vpop.f32.mrf.mxu0
        %v777 = vadd.f32 0.0, %v776
        %v778 = vpop.f32.mrf.mxu0
        %v779 = vpop.f32.mrf.mxu0
        %v780 = vadd.f32 0.0, %v779
        %v781 = vpop.f32.mrf.mxu0
        %782 = vmatprep.mubr.bf16.mxu0 0
        %783 = vmatmul.mubr.bf16.gmra.mxu0 %v519
        %v784 = vpop.f32.mrf.mxu0
        %v785 = vadd.f32 0.0, %v784
        %v786 = vpop.f32.mrf.mxu0
        %v787 = vpop.f32.mrf.mxu0
        %v788 = vadd.f32 0.0, %v787
        %v789 = vpop.f32.mrf.mxu0
        %790 = vmatprep.mubr.bf16.mxu0 0
        %791 = vmatmul.mubr.bf16.gmra.mxu0 %v520
        %v792 = vpop.f32.mrf.mxu0
        %v793 = vadd.f32 0.0, %v792
        %v794 = vpop.f32.mrf.mxu0
        %v795 = vpop.f32.mrf.mxu0
        %v796 = vadd.f32 0.0, %v795
        %v797 = vpop.f32.mrf.mxu0
        %798 = vmatprep.mubr.bf16.mxu0 0
        %799 = vmatmul.mubr.bf16.gmra.mxu0 %v521
        %v800 = vpop.f32.mrf.mxu0
        %v801 = vadd.f32 0.0, %v800
        %v802 = vpop.f32.mrf.mxu0
        %v803 = vpop.f32.mrf.mxu0
        %v804 = vadd.f32 0.0, %v803
        %v805 = vpop.f32.mrf.mxu0
        %806 = vmatprep.mubr.bf16.mxu0 0
        %807 = vmatmul.mubr.bf16.gmra.mxu0 %v522
        %v808 = vpop.f32.mrf.mxu0
        %v809 = vadd.f32 0.0, %v808
        %v810 = vpop.f32.mrf.mxu0
        %v811 = vpop.f32.mrf.mxu0
        %v812 = vadd.f32 0.0, %v811
        %v813 = vpop.f32.mrf.mxu0
        %814 = vmatprep.mubr.bf16.mxu0 0
        %815 = vmatmul.mubr.bf16.gmra.mxu0 %v523
        %v816 = vpop.f32.mrf.mxu0
        %v817 = vadd.f32 0.0, %v816
        %v818 = vpop.f32.mrf.mxu0
        %v819 = vpop.f32.mrf.mxu0
        %v820 = vadd.f32 0.0, %v819
        %v821 = vpop.f32.mrf.mxu0
        %822 = vmatprep.mubr.bf16.mxu0 0
        %823 = vmatmul.mubr.bf16.gmra.mxu0 %v524
        %v824 = vpop.f32.mrf.mxu0
        %v825 = vadd.f32 0.0, %v824
        %v826 = vpop.f32.mrf.mxu0
        %v827 = vpop.f32.mrf.mxu0
        %v828 = vadd.f32 0.0, %v827
        %v829 = vpop.f32.mrf.mxu0
        %830 = vmatprep.mubr.bf16.mxu0 0
        %831 = vmatmul.mubr.bf16.gmra.mxu0 %v525
        %v832 = vpop.f32.mrf.mxu0
        %v833 = vadd.f32 0.0, %v832
        %v834 = vpop.f32.mrf.mxu0
        %v835 = vpop.f32.mrf.mxu0
        %v836 = vadd.f32 0.0, %v835
        %v837 = vpop.f32.mrf.mxu0
        %838 = vmatprep.mubr.bf16.mxu0 0
        %839 = vmatmul.mubr.bf16.gmra.mxu0 %v526
        %v840 = vpop.f32.mrf.mxu0
        %v841 = vadd.f32 0.0, %v840
        %v842 = vpop.f32.mrf.mxu0
        %v843 = vpop.f32.mrf.mxu0
        %v844 = vadd.f32 0.0, %v843
        %v845 = vpop.f32.mrf.mxu0
        %846 = vmatprep.mubr.bf16.mxu0 0
        %847 = vmatmul.mubr.bf16.gmra.mxu0 %v527
        %v848 = vpop.f32.mrf.mxu0
        %v849 = vadd.f32 0.0, %v848
        %v850 = vpop.f32.mrf.mxu0
        %v851 = vpop.f32.mrf.mxu0
        %v852 = vadd.f32 0.0, %v851
        %v853 = vpop.f32.mrf.mxu0
        %854 = vmatprep.mubr.bf16.mxu0 0
        %855 = vmatmul.mubr.bf16.gmra.mxu0 %v528
        %v856 = vpop.f32.mrf.mxu0
        %v857 = vadd.f32 0.0, %v856
        %v858 = vpop.f32.mrf.mxu0
        %v859 = vpop.f32.mrf.mxu0
        %v860 = vadd.f32 0.0, %v859
        %v861 = vpop.f32.mrf.mxu0
        %862 = vmatprep.mubr.bf16.mxu0 0
        %863 = vmatmul.mubr.bf16.gmra.mxu0 %v529
        %v864 = vpop.f32.mrf.mxu0
        %v865 = vadd.f32 0.0, %v864
        %v866 = vpop.f32.mrf.mxu0
        %v867 = vpop.f32.mrf.mxu0
        %v868 = vadd.f32 0.0, %v867
        %v869 = vpop.f32.mrf.mxu0
        %870 = vmatprep.mubr.bf16.mxu0 0
        %871 = vmatmul.mubr.bf16.gmra.mxu0 %v530
        %v872 = vpop.f32.mrf.mxu0
        %v873 = vadd.f32 0.0, %v872
        %v874 = vpop.f32.mrf.mxu0
        %v875 = vpop.f32.mrf.mxu0
        %v876 = vadd.f32 0.0, %v875
        %v877 = vpop.f32.mrf.mxu0
        %878 = vmatprep.mubr.bf16.mxu0 0
        %879 = vmatmul.mubr.bf16.gmra.mxu0 %v531
        %v880 = vpop.f32.mrf.mxu0
        %v881 = vadd.f32 0.0, %v880
        %v882 = vpop.f32.mrf.mxu0
        %v883 = vpop.f32.mrf.mxu0
        %v884 = vadd.f32 0.0, %v883
        %v885 = vpop.f32.mrf.mxu0
        %886 = vmatprep.mubr.bf16.mxu0 0
        %887 = vmatmul.mubr.bf16.gmra.mxu0 %v532
        %v888 = vpop.f32.mrf.mxu0
        %v889 = vadd.f32 0.0, %v888
        %v890 = vpop.f32.mrf.mxu0
        %v891 = vpop.f32.mrf.mxu0
        %v892 = vadd.f32 0.0, %v891
        %v893 = vpop.f32.mrf.mxu0
        %894 = vmatprep.mubr.bf16.mxu0 0
        %895 = vmatmul.mubr.bf16.gmra.mxu0 %v533
        %v896 = vpop.f32.mrf.mxu0
        %v897 = vadd.f32 0.0, %v896
        %v898 = vpop.f32.mrf.mxu0
        %v899 = vpop.f32.mrf.mxu0
        %v900 = vadd.f32 0.0, %v899
        %v901 = vpop.f32.mrf.mxu0
        %902 = vdwg.mxu0
        %v903 = vmax.f32 %v649, %v652
        %v904 = vrot.slane %v903, 4
        %v905 = vmax.f32 %v903, %v904
        %v906 = vrot.slane %v905, 2
        %v907 = vmax.f32 %v905, %v906
        %v908 = vrot.slane %v907, 1
        %v909 = vmax.f32 %v907, %v908
        %v910 = vmax.f32 %v657, %v660
        %v911 = vrot.slane %v910, 4
        %v912 = vmax.f32 %v910, %v911
        %v913 = vrot.slane %v912, 2
        %v914 = vmax.f32 %v912, %v913
        %v915 = vrot.slane %v914, 1
        %v916 = vmax.f32 %v914, %v915
        %v917 = vmax.f32 %v665, %v668
        %v918 = vrot.slane %v917, 4
        %v919 = vmax.f32 %v917, %v918
        %v920 = vrot.slane %v919, 2
        %v921 = vmax.f32 %v919, %v920
        %v922 = vrot.slane %v921, 1
        %v923 = vmax.f32 %v921, %v922
        %v924 = vmax.f32 %v673, %v676
        %v925 = vrot.slane %v924, 4
        %v926 = vmax.f32 %v924, %v925
        %v927 = vrot.slane %v926, 2
        %v928 = vmax.f32 %v926, %v927
        %v929 = vrot.slane %v928, 1
        %v930 = vmax.f32 %v928, %v929
        %v931 = vmax.f32 %v681, %v684
        %v932 = vrot.slane %v931, 4
        %v933 = vmax.f32 %v931, %v932
        %v934 = vrot.slane %v933, 2
        %v935 = vmax.f32 %v933, %v934
        %v936 = vrot.slane %v935, 1
        %v937 = vmax.f32 %v935, %v936
        %v938 = vmax.f32 %v689, %v692
        %v939 = vrot.slane %v938, 4
        %v940 = vmax.f32 %v938, %v939
        %v941 = vrot.slane %v940, 2
        %v942 = vmax.f32 %v940, %v941
        %v943 = vrot.slane %v942, 1
        %v944 = vmax.f32 %v942, %v943
        %v945 = vmax.f32 %v697, %v700
        %v946 = vrot.slane %v945, 4
        %v947 = vmax.f32 %v945, %v946
        %v948 = vrot.slane %v947, 2
        %v949 = vmax.f32 %v947, %v948
        %v950 = vrot.slane %v949, 1
        %v951 = vmax.f32 %v949, %v950
        %v952 = vmax.f32 %v705, %v708
        %v953 = vrot.slane %v952, 4
        %v954 = vmax.f32 %v952, %v953
        %v955 = vrot.slane %v954, 2
        %v956 = vmax.f32 %v954, %v955
        %v957 = vrot.slane %v956, 1
        %v958 = vmax.f32 %v956, %v957
        %v959 = vmax.f32 %v713, %v716
        %v960 = vrot.slane %v959, 4
        %v961 = vmax.f32 %v959, %v960
        %v962 = vrot.slane %v961, 2
        %v963 = vmax.f32 %v961, %v962
        %v964 = vrot.slane %v963, 1
        %v965 = vmax.f32 %v963, %v964
        %v966 = vmax.f32 %v721, %v724
        %v967 = vrot.slane %v966, 4
        %v968 = vmax.f32 %v966, %v967
        %v969 = vrot.slane %v968, 2
        %v970 = vmax.f32 %v968, %v969
        %v971 = vrot.slane %v970, 1
        %v972 = vmax.f32 %v970, %v971
        %v973 = vmax.f32 %v729, %v732
        %v974 = vrot.slane %v973, 4
        %v975 = vmax.f32 %v973, %v974
        %v976 = vrot.slane %v975, 2
        %v977 = vmax.f32 %v975, %v976
        %v978 = vrot.slane %v977, 1
        %v979 = vmax.f32 %v977, %v978
        %v980 = vmax.f32 %v737, %v740
        %v981 = vrot.slane %v980, 4
        %v982 = vmax.f32 %v980, %v981
        %v983 = vrot.slane %v982, 2
        %v984 = vmax.f32 %v982, %v983
        %v985 = vrot.slane %v984, 1
        %v986 = vmax.f32 %v984, %v985
        %v987 = vmax.f32 %v745, %v748
        %v988 = vrot.slane %v987, 4
        %v989 = vmax.f32 %v987, %v988
        %v990 = vrot.slane %v989, 2
        %v991 = vmax.f32 %v989, %v990
        %v992 = vrot.slane %v991, 1
        %v993 = vmax.f32 %v991, %v992
        %v994 = vmax.f32 %v753, %v756
        %v995 = vrot.slane %v994, 4
        %v996 = vmax.f32 %v994, %v995
        %v997 = vrot.slane %v996, 2
        %v998 = vmax.f32 %v996, %v997
        %v999 = vrot.slane %v998, 1
        %v1000 = vmax.f32 %v998, %v999
        %v1001 = vmax.f32 %v761, %v764
        %v1002 = vrot.slane %v1001, 4
        %v1003 = vmax.f32 %v1001, %v1002
        %v1004 = vrot.slane %v1003, 2
        %v1005 = vmax.f32 %v1003, %v1004
        %v1006 = vrot.slane %v1005, 1
        %v1007 = vmax.f32 %v1005, %v1006
        %v1008 = vmax.f32 %v769, %v772
        %v1009 = vrot.slane %v1008, 4
        %v1010 = vmax.f32 %v1008, %v1009
        %v1011 = vrot.slane %v1010, 2
        %v1012 = vmax.f32 %v1010, %v1011
        %v1013 = vrot.slane %v1012, 1
        %v1014 = vmax.f32 %v1012, %v1013
        %v1015 = vmax.f32 %v777, %v780
        %v1016 = vrot.slane %v1015, 4
        %v1017 = vmax.f32 %v1015, %v1016
        %v1018 = vrot.slane %v1017, 2
        %v1019 = vmax.f32 %v1017, %v1018
        %v1020 = vrot.slane %v1019, 1
        %v1021 = vmax.f32 %v1019, %v1020
        %v1022 = vmax.f32 %v785, %v788
        %v1023 = vrot.slane %v1022, 4
        %v1024 = vmax.f32 %v1022, %v1023
        %v1025 = vrot.slane %v1024, 2
        %v1026 = vmax.f32 %v1024, %v1025
        %v1027 = vrot.slane %v1026, 1
        %v1028 = vmax.f32 %v1026, %v1027
        %v1029 = vmax.f32 %v793, %v796
        %v1030 = vrot.slane %v1029, 4
        %v1031 = vmax.f32 %v1029, %v1030
        %v1032 = vrot.slane %v1031, 2
        %v1033 = vmax.f32 %v1031, %v1032
        %v1034 = vrot.slane %v1033, 1
        %v1035 = vmax.f32 %v1033, %v1034
        %v1036 = vmax.f32 %v801, %v804
        %v1037 = vrot.slane %v1036, 4
        %v1038 = vmax.f32 %v1036, %v1037
        %v1039 = vrot.slane %v1038, 2
        %v1040 = vmax.f32 %v1038, %v1039
        %v1041 = vrot.slane %v1040, 1
        %v1042 = vmax.f32 %v1040, %v1041
        %v1043 = vmax.f32 %v809, %v812
        %v1044 = vrot.slane %v1043, 4
        %v1045 = vmax.f32 %v1043, %v1044
        %v1046 = vrot.slane %v1045, 2
        %v1047 = vmax.f32 %v1045, %v1046
        %v1048 = vrot.slane %v1047, 1
        %v1049 = vmax.f32 %v1047, %v1048
        %v1050 = vmax.f32 %v817, %v820
        %v1051 = vrot.slane %v1050, 4
        %v1052 = vmax.f32 %v1050, %v1051
        %v1053 = vrot.slane %v1052, 2
        %v1054 = vmax.f32 %v1052, %v1053
        %v1055 = vrot.slane %v1054, 1
        %v1056 = vmax.f32 %v1054, %v1055
        %v1057 = vmax.f32 %v825, %v828
        %v1058 = vrot.slane %v1057, 4
        %v1059 = vmax.f32 %v1057, %v1058
        %v1060 = vrot.slane %v1059, 2
        %v1061 = vmax.f32 %v1059, %v1060
        %v1062 = vrot.slane %v1061, 1
        %v1063 = vmax.f32 %v1061, %v1062
        %v1064 = vmax.f32 %v833, %v836
        %v1065 = vrot.slane %v1064, 4
        %v1066 = vmax.f32 %v1064, %v1065
        %v1067 = vrot.slane %v1066, 2
        %v1068 = vmax.f32 %v1066, %v1067
        %v1069 = vrot.slane %v1068, 1
        %v1070 = vmax.f32 %v1068, %v1069
        %v1071 = vmax.f32 %v841, %v844
        %v1072 = vrot.slane %v1071, 4
        %v1073 = vmax.f32 %v1071, %v1072
        %v1074 = vrot.slane %v1073, 2
        %v1075 = vmax.f32 %v1073, %v1074
        %v1076 = vrot.slane %v1075, 1
        %v1077 = vmax.f32 %v1075, %v1076
        %v1078 = vmax.f32 %v849, %v852
        %v1079 = vrot.slane %v1078, 4
        %v1080 = vmax.f32 %v1078, %v1079
        %v1081 = vrot.slane %v1080, 2
        %v1082 = vmax.f32 %v1080, %v1081
        %v1083 = vrot.slane %v1082, 1
        %v1084 = vmax.f32 %v1082, %v1083
        %v1085 = vmax.f32 %v857, %v860
        %v1086 = vrot.slane %v1085, 4
        %v1087 = vmax.f32 %v1085, %v1086
        %v1088 = vrot.slane %v1087, 2
        %v1089 = vmax.f32 %v1087, %v1088
        %v1090 = vrot.slane %v1089, 1
        %v1091 = vmax.f32 %v1089, %v1090
        %v1092 = vmax.f32 %v865, %v868
        %v1093 = vrot.slane %v1092, 4
        %v1094 = vmax.f32 %v1092, %v1093
        %v1095 = vrot.slane %v1094, 2
        %v1096 = vmax.f32 %v1094, %v1095
        %v1097 = vrot.slane %v1096, 1
        %v1098 = vmax.f32 %v1096, %v1097
        %v1099 = vmax.f32 %v873, %v876
        %v1100 = vrot.slane %v1099, 4
        %v1101 = vmax.f32 %v1099, %v1100
        %v1102 = vrot.slane %v1101, 2
        %v1103 = vmax.f32 %v1101, %v1102
        %v1104 = vrot.slane %v1103, 1
        %v1105 = vmax.f32 %v1103, %v1104
        %v1106 = vmax.f32 %v881, %v884
        %v1107 = vrot.slane %v1106, 4
        %v1108 = vmax.f32 %v1106, %v1107
        %v1109 = vrot.slane %v1108, 2
        %v1110 = vmax.f32 %v1108, %v1109
        %v1111 = vrot.slane %v1110, 1
        %v1112 = vmax.f32 %v1110, %v1111
        %v1113 = vmax.f32 %v889, %v892
        %v1114 = vrot.slane %v1113, 4
        %v1115 = vmax.f32 %v1113, %v1114
        %v1116 = vrot.slane %v1115, 2
        %v1117 = vmax.f32 %v1115, %v1116
        %v1118 = vrot.slane %v1117, 1
        %v1119 = vmax.f32 %v1117, %v1118
        %v1120 = vmax.f32 %v897, %v900
        %v1121 = vrot.slane %v1120, 4
        %v1122 = vmax.f32 %v1120, %v1121
        %v1123 = vrot.slane %v1122, 2
        %v1124 = vmax.f32 %v1122, %v1123
        %v1125 = vrot.slane %v1124, 1
        %v1126 = vmax.f32 %v1124, %v1125
        %v1127 = vld [vmem:[#allocation5] sm:$0x1]
        %v1128 = vlaneseq
        %v1129 = vshrl.u32 %v1128, 7
        %v1130 = vsub.s32 0, %v1129
        %v1131 = vrot.slane %v1127, %v1130
        %v1132 = vadd.f32 %v909, %v1131
        %v1133 = vadd.f32 %v916, %v1131
        %v1134 = vadd.f32 %v923, %v1131
        %v1135 = vadd.f32 %v930, %v1131
        %v1136 = vadd.f32 %v937, %v1131
        %v1137 = vadd.f32 %v944, %v1131
        %v1138 = vadd.f32 %v951, %v1131
        %v1139 = vadd.f32 %v958, %v1131
        %v1140 = vadd.f32 %v965, %v1131
        %v1141 = vadd.f32 %v972, %v1131
        %v1142 = vadd.f32 %v979, %v1131
        %v1143 = vadd.f32 %v986, %v1131
        %v1144 = vadd.f32 %v993, %v1131
        %v1145 = vadd.f32 %v1000, %v1131
        %v1146 = vadd.f32 %v1007, %v1131
        %v1147 = vadd.f32 %v1014, %v1131
        %v1148 = vadd.f32 %v1021, %v1131
        %v1149 = vadd.f32 %v1028, %v1131
        %v1150 = vadd.f32 %v1035, %v1131
        %v1151 = vadd.f32 %v1042, %v1131
        %v1152 = vadd.f32 %v1049, %v1131
        %v1153 = vadd.f32 %v1056, %v1131
        %v1154 = vadd.f32 %v1063, %v1131
        %v1155 = vadd.f32 %v1070, %v1131
        %v1156 = vadd.f32 %v1077, %v1131
        %v1157 = vadd.f32 %v1084, %v1131
        %v1158 = vadd.f32 %v1091, %v1131
        %v1159 = vadd.f32 %v1098, %v1131
        %v1160 = vadd.f32 %v1105, %v1131
        %v1161 = vadd.f32 %v1112, %v1131
        %v1162 = vadd.f32 %v1119, %v1131
        %v1163 = vadd.f32 %v1126, %v1131
        %v1164 = vmax.f32 %v1132, 0.0
        %v1165 = vmax.f32 %v1133, 0.0
        %v1166 = vmax.f32 %v1134, 0.0
        %v1167 = vmax.f32 %v1135, 0.0
        %v1168 = vmax.f32 %v1136, 0.0
        %v1169 = vmax.f32 %v1137, 0.0
        %v1170 = vmax.f32 %v1138, 0.0
        %v1171 = vmax.f32 %v1139, 0.0
        %v1172 = vmax.f32 %v1140, 0.0
        %v1173 = vmax.f32 %v1141, 0.0
        %v1174 = vmax.f32 %v1142, 0.0
        %v1175 = vmax.f32 %v1143, 0.0
        %v1176 = vmax.f32 %v1144, 0.0
        %v1177 = vmax.f32 %v1145, 0.0
        %v1178 = vmax.f32 %v1146, 0.0
        %v1179 = vmax.f32 %v1147, 0.0
        %v1180 = vmax.f32 %v1148, 0.0
        %v1181 = vmax.f32 %v1149, 0.0
        %v1182 = vmax.f32 %v1150, 0.0
        %v1183 = vmax.f32 %v1151, 0.0
        %v1184 = vmax.f32 %v1152, 0.0
        %v1185 = vmax.f32 %v1153, 0.0
        %v1186 = vmax.f32 %v1154, 0.0
        %v1187 = vmax.f32 %v1155, 0.0
        %v1188 = vmax.f32 %v1156, 0.0
        %v1189 = vmax.f32 %v1157, 0.0
        %v1190 = vmax.f32 %v1158, 0.0
        %v1191 = vmax.f32 %v1159, 0.0
        %v1192 = vmax.f32 %v1160, 0.0
        %v1193 = vmax.f32 %v1161, 0.0
        %v1194 = vmax.f32 %v1162, 0.0
        %v1195 = vmax.f32 %v1163, 0.0
        %v1196 = vlaneseq
        %v1197 = vand.u32 %v1196, 127
        %vm1198 = vcmp.lt.s32.totalorder %v1197, 32
        %v1231 = vrot.slane %v1165, 7
        %vm1232 = vcmask 1041409
        %v1233 = vsel %vm1232, %v1231, %v1164
        %v1234 = vrot.slane %v1166, 6
        %vm1235 = vcmask 1042434
        %v1236 = vsel %vm1235, %v1234, %v1233
        %v1237 = vrot.slane %v1167, 5
        %vm1238 = vcmask 1043459
        %v1239 = vsel %vm1238, %v1237, %v1236
        %v1240 = vrot.slane %v1168, 4
        %vm1241 = vcmask 1044484
        %v1242 = vsel %vm1241, %v1240, %v1239
        %v1243 = vrot.slane %v1169, 3
        %vm1244 = vcmask 1045509
        %v1245 = vsel %vm1244, %v1243, %v1242
        %v1246 = vrot.slane %v1170, 2
        %vm1247 = vcmask 1046534
        %v1248 = vsel %vm1247, %v1246, %v1245
        %v1249 = vrot.slane %v1171, 1
        %vm1250 = vcmask 1047559
        %v1251 = vsel %vm1250, %v1249, %v1248
        %v1252 = vrot.slane %v1173, 7
        %v1253 = vsel %vm1232, %v1252, %v1172
        %v1254 = vrot.slane %v1174, 6
        %v1255 = vsel %vm1235, %v1254, %v1253
        %v1256 = vrot.slane %v1175, 5
        %v1257 = vsel %vm1238, %v1256, %v1255
        %v1258 = vrot.slane %v1176, 4
        %v1259 = vsel %vm1241, %v1258, %v1257
        %v1260 = vrot.slane %v1177, 3
        %v1261 = vsel %vm1244, %v1260, %v1259
        %v1262 = vrot.slane %v1178, 2
        %v1263 = vsel %vm1247, %v1262, %v1261
        %v1264 = vrot.slane %v1179, 1
        %v1265 = vsel %vm1250, %v1264, %v1263
        %v1266 = vrot.slane %v1181, 7
        %v1267 = vsel %vm1232, %v1266, %v1180
        %v1268 = vrot.slane %v1182, 6
        %v1269 = vsel %vm1235, %v1268, %v1267
        %v1270 = vrot.slane %v1183, 5
        %v1271 = vsel %vm1238, %v1270, %v1269
        %v1272 = vrot.slane %v1184, 4
        %v1273 = vsel %vm1241, %v1272, %v1271
        %v1274 = vrot.slane %v1185, 3
        %v1275 = vsel %vm1244, %v1274, %v1273
        %v1276 = vrot.slane %v1186, 2
        %v1277 = vsel %vm1247, %v1276, %v1275
        %v1278 = vrot.slane %v1187, 1
        %v1279 = vsel %vm1250, %v1278, %v1277
        %v1280 = vrot.slane %v1189, 7
        %v1281 = vsel %vm1232, %v1280, %v1188
        %v1282 = vrot.slane %v1190, 6
        %v1283 = vsel %vm1235, %v1282, %v1281
        %v1284 = vrot.slane %v1191, 5
        %v1285 = vsel %vm1238, %v1284, %v1283
        %v1286 = vrot.slane %v1192, 4
        %v1287 = vsel %vm1241, %v1286, %v1285
        %v1288 = vrot.slane %v1193, 3
        %v1289 = vsel %vm1244, %v1288, %v1287
        %v1290 = vrot.slane %v1194, 2
        %v1291 = vsel %vm1247, %v1290, %v1289
        %v1292 = vrot.slane %v1195, 1
        %v1293 = vsel %vm1250, %v1292, %v1291
        %1298 = vadd.xlane.f32.xlu0 %v1251
        %v1299 = vpop.xlane.xlu0 %1298
        %1300 = vadd.xlane.f32.xlu0 %v1265
        %v1301 = vpop.xlane.xlu0 %1300
        %1302 = vadd.xlane.f32.xlu0 %v1279
        %v1303 = vpop.xlane.xlu0 %1302
        %1304 = vadd.xlane.f32.xlu0 %v1293
        %v1305 = vpop.xlane.xlu0 %1304
        %v1306 = vmul.f32 %v1299, 0.03125
        %v1307 = vmul.f32 %v1301, 0.03125
        %v1308 = vmul.f32 %v1303, 0.03125
        %v1309 = vmul.f32 %v1305, 0.03125
        %v1314 = vrot.slane %v1306, 1
        %v1315 = vrot.slane %v1306, 2
        %v1316 = vrot.slane %v1306, 3
        %v1317 = vrot.slane %v1306, 4
        %v1318 = vrot.slane %v1306, 5
        %v1319 = vrot.slane %v1306, 6
        %v1320 = vrot.slane %v1306, 7
        %v1321 = vrot.slane %v1307, 1
        %v1322 = vrot.slane %v1307, 2
        %v1323 = vrot.slane %v1307, 3
        %v1324 = vrot.slane %v1307, 4
        %v1325 = vrot.slane %v1307, 5
        %v1326 = vrot.slane %v1307, 6
        %v1327 = vrot.slane %v1307, 7
        %v1328 = vrot.slane %v1308, 1
        %v1329 = vrot.slane %v1308, 2
        %v1330 = vrot.slane %v1308, 3
        %v1331 = vrot.slane %v1308, 4
        %v1332 = vrot.slane %v1308, 5
        %v1333 = vrot.slane %v1308, 6
        %v1334 = vrot.slane %v1308, 7
        %v1335 = vrot.slane %v1309, 1
        %v1336 = vrot.slane %v1309, 2
        %v1337 = vrot.slane %v1309, 3
        %v1338 = vrot.slane %v1309, 4
        %v1339 = vrot.slane %v1309, 5
        %v1340 = vrot.slane %v1309, 6
        %v1341 = vrot.slane %v1309, 7
        %v1374 = vsub.f32 %v1164, %v1306
        %v1375 = vsub.f32 %v1165, %v1314
        %v1376 = vsub.f32 %v1166, %v1315
        %v1377 = vsub.f32 %v1167, %v1316
        %v1378 = vsub.f32 %v1168, %v1317
        %v1379 = vsub.f32 %v1169, %v1318
        %v1380 = vsub.f32 %v1170, %v1319
        %v1381 = vsub.f32 %v1171, %v1320
        %v1382 = vsub.f32 %v1172, %v1307
        %v1383 = vsub.f32 %v1173, %v1321
        %v1384 = vsub.f32 %v1174, %v1322
        %v1385 = vsub.f32 %v1175, %v1323
        %v1386 = vsub.f32 %v1176, %v1324
        %v1387 = vsub.f32 %v1177, %v1325
        %v1388 = vsub.f32 %v1178, %v1326
        %v1389 = vsub.f32 %v1179, %v1327
        %v1390 = vsub.f32 %v1180, %v1308
        %v1391 = vsub.f32 %v1181, %v1328
        %v1392 = vsub.f32 %v1182, %v1329
        %v1393 = vsub.f32 %v1183, %v1330
        %v1394 = vsub.f32 %v1184, %v1331
        %v1395 = vsub.f32 %v1185, %v1332
        %v1396 = vsub.f32 %v1186, %v1333
        %v1397 = vsub.f32 %v1187, %v1334
        %v1398 = vsub.f32 %v1188, %v1309
        %v1399 = vsub.f32 %v1189, %v1335
        %v1400 = vsub.f32 %v1190, %v1336
        %v1401 = vsub.f32 %v1191, %v1337
        %v1402 = vsub.f32 %v1192, %v1338
        %v1403 = vsub.f32 %v1193, %v1339
        %v1404 = vsub.f32 %v1194, %v1340
        %v1405 = vsub.f32 %v1195, %v1341
        %v1438 = vrot.slane %v1375, 7
        %v1439 = vsel %vm1232, %v1438, %v1374
        %v1440 = vrot.slane %v1376, 6
        %v1441 = vsel %vm1235, %v1440, %v1439
        %v1442 = vrot.slane %v1377, 5
        %v1443 = vsel %vm1238, %v1442, %v1441
        %v1444 = vrot.slane %v1378, 4
        %v1445 = vsel %vm1241, %v1444, %v1443
        %v1446 = vrot.slane %v1379, 3
        %v1447 = vsel %vm1244, %v1446, %v1445
        %v1448 = vrot.slane %v1380, 2
        %v1449 = vsel %vm1247, %v1448, %v1447
        %v1450 = vrot.slane %v1381, 1
        %v1451 = vsel %vm1250, %v1450, %v1449
        %v1452 = vrot.slane %v1383, 7
        %v1453 = vsel %vm1232, %v1452, %v1382
        %v1454 = vrot.slane %v1384, 6
        %v1455 = vsel %vm1235, %v1454, %v1453
        %v1456 = vrot.slane %v1385, 5
        %v1457 = vsel %vm1238, %v1456, %v1455
        %v1458 = vrot.slane %v1386, 4
        %v1459 = vsel %vm1241, %v1458, %v1457
        %v1460 = vrot.slane %v1387, 3
        %v1461 = vsel %vm1244, %v1460, %v1459
        %v1462 = vrot.slane %v1388, 2
        %v1463 = vsel %vm1247, %v1462, %v1461
        %v1464 = vrot.slane %v1389, 1
        %v1465 = vsel %vm1250, %v1464, %v1463
        %v1466 = vrot.slane %v1391, 7
        %v1467 = vsel %vm1232, %v1466, %v1390
        %v1468 = vrot.slane %v1392, 6
        %v1469 = vsel %vm1235, %v1468, %v1467
        %v1470 = vrot.slane %v1393, 5
        %v1471 = vsel %vm1238, %v1470, %v1469
        %v1472 = vrot.slane %v1394, 4
        %v1473 = vsel %vm1241, %v1472, %v1471
        %v1474 = vrot.slane %v1395, 3
        %v1475 = vsel %vm1244, %v1474, %v1473
        %v1476 = vrot.slane %v1396, 2
        %v1477 = vsel %vm1247, %v1476, %v1475
        %v1478 = vrot.slane %v1397, 1
        %v1479 = vsel %vm1250, %v1478, %v1477
        %v1480 = vrot.slane %v1399, 7
        %v1481 = vsel %vm1232, %v1480, %v1398
        %v1482 = vrot.slane %v1400, 6
        %v1483 = vsel %vm1235, %v1482, %v1481
        %v1484 = vrot.slane %v1401, 5
        %v1485 = vsel %vm1238, %v1484, %v1483
        %v1486 = vrot.slane %v1402, 4
        %v1487 = vsel %vm1241, %v1486, %v1485
        %v1488 = vrot.slane %v1403, 3
        %v1489 = vsel %vm1244, %v1488, %v1487
        %v1490 = vrot.slane %v1404, 2
        %v1491 = vsel %vm1247, %v1490, %v1489
        %v1492 = vrot.slane %v1405, 1
        %v1493 = vsel %vm1250, %v1492, %v1491
        %v1498 = vsel %vm1198, %v1451, 0.0
        %v1499 = vsel %vm1198, %v1465, 0.0
        %v1500 = vsel %vm1198, %v1479, 0.0
        %v1501 = vsel %vm1198, %v1493, 0.0
        %v1502 = vmul.f32 %v1498, %v1498
        %v1503 = vmul.f32 %v1499, %v1499
        %v1504 = vmul.f32 %v1500, %v1500
        %v1505 = vmul.f32 %v1501, %v1501
        %1506 = vadd.xlane.f32.xlu0 %v1502
        %v1507 = vpop.xlane.xlu0 %1506
        %1508 = vadd.xlane.f32.xlu0 %v1503
        %v1509 = vpop.xlane.xlu0 %1508
        %1510 = vadd.xlane.f32.xlu0 %v1504
        %v1511 = vpop.xlane.xlu0 %1510
        %1512 = vadd.xlane.f32.xlu0 %v1505
        %v1513 = vpop.xlane.xlu0 %1512
        %v1514 = vmul.f32 %v1507, 0.03125
        %v1515 = vmul.f32 %v1509, 0.03125
        %v1516 = vmul.f32 %v1511, 0.03125
        %v1517 = vmul.f32 %v1513, 0.03125
        %v1518 = vadd.f32 %v1514, 1e-05
        %v1519 = vadd.f32 %v1515, 1e-05
        %v1520 = vadd.f32 %v1516, 1e-05
        %v1521 = vadd.f32 %v1517, 1e-05
        %v1522 = vrsqrt.pop %v1518
        %v1523 = vrsqrt.pop %v1519
        %v1524 = vrsqrt.pop %v1520
        %v1525 = vrsqrt.pop %v1521
        %v1526 = vmul.f32 %v1498, %v1522
        %v1527 = vmul.f32 %v1499, %v1523
        %v1528 = vmul.f32 %v1500, %v1524
        %v1529 = vmul.f32 %v1501, %v1525
        %v1530 = vld [vmem:[#allocation5 + $0x1] sm:$0x1]
        %v1531 = vlaneseq
        %v1532 = vshrl.u32 %v1531, 7
        %v1533 = vsub.s32 0, %v1532
        %v1534 = vrot.slane %v1530, %v1533
        %v1535 = vmul.f32 %v1526, %v1534
        %v1536 = vmul.f32 %v1527, %v1534
        %v1537 = vmul.f32 %v1528, %v1534
        %v1538 = vmul.f32 %v1529, %v1534
        %v1539 = vld [vmem:[#allocation5 + $0x2] sm:$0x1]
        %v1540 = vlaneseq
        %v1541 = vshrl.u32 %v1540, 7
        %v1542 = vsub.s32 0, %v1541
        %v1543 = vrot.slane %v1539, %v1542
        %v1544 = vadd.f32 %v1535, %v1543
        %v1545 = vadd.f32 %v1536, %v1543
        %v1546 = vadd.f32 %v1537, %v1543
        %v1547 = vadd.f32 %v1538, %v1543
        %v1548 = vpack.c.bf16 %v1545, %v1544
        %v1549 = vpack.c.bf16 %v1547, %v1546
        %v1550 = vld [vmem:[#allocation7] sm:$0xf]
        %v1551 = vld [vmem:[#allocation7 + $0x4] sm:$0xf]
        %v1552 = vld [vmem:[#allocation7 + $0x8] sm:$0xf]
        %v1553 = vld [vmem:[#allocation7 + $0xc] sm:$0xf]
        %v1554 = vld [vmem:[#allocation7 + $0x10] sm:$0xf]
        %v1555 = vld [vmem:[#allocation7 + $0x14] sm:$0xf]
        %v1556 = vld [vmem:[#allocation7 + $0x18] sm:$0xf]
        %v1557 = vld [vmem:[#allocation7 + $0x1c] sm:$0xf]
        %v1558 = vld [vmem:[#allocation7 + $0x20] sm:$0xf]
        %v1559 = vld [vmem:[#allocation7 + $0x24] sm:$0xf]
        %v1560 = vld [vmem:[#allocation7 + $0x28] sm:$0xf]
        %v1561 = vld [vmem:[#allocation7 + $0x2c] sm:$0xf]
        %v1562 = vld [vmem:[#allocation7 + $0x30] sm:$0xf]
        %v1563 = vld [vmem:[#allocation7 + $0x34] sm:$0xf]
        %v1564 = vld [vmem:[#allocation7 + $0x38] sm:$0xf]
        %v1565 = vld [vmem:[#allocation7 + $0x3c] sm:$0xf]
        %v1582 = vunpack.c.l.b16 %v1550
        %v1583 = vunpack.c.l.b16 %v1551
        %v1584 = vunpack.c.l.b16 %v1552
        %v1585 = vunpack.c.l.b16 %v1553
        %v1586 = vunpack.c.l.b16 %v1554
        %v1587 = vunpack.c.l.b16 %v1555
        %v1588 = vunpack.c.l.b16 %v1556
        %v1589 = vunpack.c.l.b16 %v1557
        %v1590 = vunpack.c.l.b16 %v1558
        %v1591 = vunpack.c.l.b16 %v1559
        %v1592 = vunpack.c.l.b16 %v1560
        %v1593 = vunpack.c.l.b16 %v1561
        %v1594 = vunpack.c.l.b16 %v1562
        %v1595 = vunpack.c.l.b16 %v1563
        %v1596 = vunpack.c.l.b16 %v1564
        %v1597 = vunpack.c.l.b16 %v1565
        %v1598 = vpack.c.b16 %v1583, %v1582
        %v1599 = vpack.c.b16 %v1585, %v1584
        %v1600 = vpack.c.b16 %v1587, %v1586
        %v1601 = vpack.c.b16 %v1589, %v1588
        %v1602 = vpack.c.b16 %v1591, %v1590
        %v1603 = vpack.c.b16 %v1593, %v1592
        %v1604 = vpack.c.b16 %v1595, %v1594
        %v1605 = vpack.c.b16 %v1597, %v1596
        %1614 = vmatprep.subr.bf16.mxu0 0
        %1615 = vmatpush1.bf16.msra.mxu0 %v1605
        %1616 = vmatprep.subr.bf16.mxu0 0
        %1617 = vmatpush1.bf16.msra.mxu0 %v1604
        %1618 = vmatprep.subr.bf16.mxu0 0
        %1619 = vmatpush1.bf16.msra.mxu0 %v1603
        %1620 = vmatprep.subr.bf16.mxu0 0
        %1621 = vmatpush1.bf16.msra.mxu0 %v1602
        %1622 = vmatprep.subr.bf16.mxu0 0
        %1623 = vmatpush1.bf16.msra.mxu0 %v1601
        %1624 = vmatprep.subr.bf16.mxu0 0
        %1625 = vmatpush1.bf16.msra.mxu0 %v1600
        %1626 = vmatprep.subr.bf16.mxu0 0
        %1627 = vmatpush1.bf16.msra.mxu0 %v1599
        %1628 = vmatprep.subr.bf16.mxu0 0
        %1629 = vmatpush1.bf16.msra.mxu0 %v1598
        %1630 = vmatprep.subr.bf16.mxu0 0
        %1631 = vmatpush2.bf16.msra.mxu0 0
        %1632 = vmatprep.subr.bf16.mxu0 0
        %1633 = vmatpush2.bf16.msra.mxu0 0
        %1634 = vmatprep.subr.bf16.mxu0 0
        %1635 = vmatpush2.bf16.msra.mxu0 0
        %1636 = vmatprep.subr.bf16.mxu0 0
        %1637 = vmatpush2.bf16.msra.mxu0 0
        %1638 = vmatprep.subr.bf16.mxu0 0
        %1639 = vmatpush2.bf16.msra.mxu0 0
        %1640 = vmatprep.subr.bf16.mxu0 0
        %1641 = vmatpush2.bf16.msra.mxu0 0
        %1642 = vmatprep.subr.bf16.mxu0 0
        %1643 = vmatpush2.bf16.msra.mxu0 0
        %1644 = vmatprep.subr.bf16.mxu0 0
        %1645 = vmatpush2.bf16.msra.mxu0 0
        %1646 = vmatprep.mubr.bf16.mxu0 0
        %1647 = vmatmul.mubr.bf16.gmra.mxu0 %v1548
        %v1648 = vpop.f32.mrf.mxu0
        %v1649 = vadd.f32 0.0, %v1648
        %v1650 = vpop.f32.mrf.mxu0
        %v1651 = vpop.f32.mrf.mxu0
        %v1652 = vadd.f32 0.0, %v1651
        %v1653 = vpop.f32.mrf.mxu0
        %1654 = vmatprep.mubr.bf16.mxu0 0
        %1655 = vmatmul.mubr.bf16.gmra.mxu0 %v1549
        %v1656 = vpop.f32.mrf.mxu0
        %v1657 = vadd.f32 0.0, %v1656
        %v1658 = vpop.f32.mrf.mxu0
        %v1659 = vpop.f32.mrf.mxu0
        %v1660 = vadd.f32 0.0, %v1659
        %v1661 = vpop.f32.mrf.mxu0
        %1662 = vdwg.mxu0
        %v1663 = vld [vmem:[%s291] sm:$0xff]
        %v1664 = vld [vmem:[%s291 + $0x8] sm:$0xff]
        %v1665 = vld [vmem:[%s291 + $0x10] sm:$0xff]
        %v1666 = vld [vmem:[%s291 + $0x18] sm:$0xff]
        %1667 = vset.pattern.permute.xlu0 0
        %1668 = vperm.xlu0 %1667, %v1663
        %v1669 = vpop.permute.xlu0 %1668
        %1670 = vset.pattern.permute.xlu0 0
        %1671 = vperm.xlu0 %1670, %v1664
        %v1672 = vpop.permute.xlu0 %1671
        %1673 = vset.pattern.permute.xlu0 0
        %1674 = vperm.xlu0 %1673, %v1665
        %v1675 = vpop.permute.xlu0 %1674
        %1676 = vset.pattern.permute.xlu0 0
        %1677 = vperm.xlu0 %1676, %v1666
        %v1678 = vpop.permute.xlu0 %1677
        %vm1679 = vcmp.eq.s32.totalorder %v1197, %v1669
        %vm1680 = vcmp.eq.s32.totalorder %v1197, %v1672
        %vm1681 = vcmp.eq.s32.totalorder %v1197, %v1675
        %vm1682 = vcmp.eq.s32.totalorder %v1197, %v1678
        %v1683 = vsel %vm1679, %v1649, 0.0
        %v1684 = vsel %vm1680, %v1652, 0.0
        %v1685 = vsel %vm1681, %v1657, 0.0
        %v1686 = vsel %vm1682, %v1660, 0.0
        %1687 = vadd.xlane.f32.xlu0 %v1683
        %v1688 = vpop.xlane.xlu0 %1687
        %1689 = vadd.xlane.f32.xlu0 %v1684
        %v1690 = vpop.xlane.xlu0 %1689
        %1691 = vadd.xlane.f32.xlu0 %v1685
        %v1692 = vpop.xlane.xlu0 %1691
        %1693 = vadd.xlane.f32.xlu0 %v1686
        %v1694 = vpop.xlane.xlu0 %1693
        %vm1695 = vcmp.lt.s32.totalorder %v1197, 8
        %vm1696 = vmxor %vm1679, 1
        %vm1697 = vmxor %vm1680, 1
        %vm1698 = vmxor %vm1681, 1
        %vm1699 = vmxor %vm1682, 1
        %vm1700 = vmand %vm1695, %vm1696
        %vm1701 = vmand %vm1695, %vm1697
        %vm1702 = vmand %vm1695, %vm1698
        %vm1703 = vmand %vm1695, %vm1699
        %v1704 = vsel %vm1700, %v1649, -inf
        %v1705 = vsel %vm1701, %v1652, -inf
        %v1706 = vsel %vm1702, %v1657, -inf
        %v1707 = vsel %vm1703, %v1660, -inf
        %1708 = vmax.xlane.f32.xlu0 %v1704
        %v1709 = vpop.xlane.xlu0 %1708
        %1710 = vmax.xlane.f32.xlu0 %v1705
        %v1711 = vpop.xlane.xlu0 %1710
        %1712 = vmax.xlane.f32.xlu0 %v1706
        %v1713 = vpop.xlane.xlu0 %1712
        %1714 = vmax.xlane.f32.xlu0 %v1707
        %v1715 = vpop.xlane.xlu0 %1714
        %v1716 = vsub.f32 2.5, %v1688
        %v1717 = vsub.f32 2.5, %v1690
        %v1718 = vsub.f32 2.5, %v1692
        %v1719 = vsub.f32 2.5, %v1694
        %v1720 = vmul.f32 %v1716, 2.0
        %v1721 = vmul.f32 %v1717, 2.0
        %v1722 = vmul.f32 %v1718, 2.0
        %v1723 = vmul.f32 %v1719, 2.0
        %v1724 = vmax.f32 %v1720, 0.0
        %v1725 = vmax.f32 %v1721, 0.0
        %v1726 = vmax.f32 %v1722, 0.0
        %v1727 = vmax.f32 %v1723, 0.0
        %v1728 = vand.u32 2147483647, %v1720
        %v1729 = vand.u32 2147483647, %v1721
        %v1730 = vand.u32 2147483647, %v1722
        %v1731 = vand.u32 2147483647, %v1723
        %v1732 = vsub.f32 0.0, %v1728
        %v1733 = vsub.f32 0.0, %v1729
        %v1734 = vsub.f32 0.0, %v1730
        %v1735 = vsub.f32 0.0, %v1731
        %v1736 = vmul.f32 %v1732, 1.442695
        %v1737 = vpow.pop %v1736
        %v1738 = vmul.f32 %v1733, 1.442695
        %v1739 = vpow.pop %v1738
        %v1740 = vmul.f32 %v1734, 1.442695
        %v1741 = vpow.pop %v1740
        %v1742 = vmul.f32 %v1735, 1.442695
        %v1743 = vpow.pop %v1742
        %v1744 = vadd.f32 %v1737, 1.0
        %v1745 = vadd.f32 %v1739, 1.0
        %v1746 = vadd.f32 %v1741, 1.0
        %v1747 = vadd.f32 %v1743, 1.0
        %v1748 = vlog2.pop %v1744
        %v1749 = vmul.f32 %v1748, 0.6931472
        %v1750 = vlog2.pop %v1745
        %v1751 = vmul.f32 %v1750, 0.6931472
        %v1752 = vlog2.pop %v1746
        %v1753 = vmul.f32 %v1752, 0.6931472
        %v1754 = vlog2.pop %v1747
        %v1755 = vmul.f32 %v1754, 0.6931472
        %v1756 = vadd.f32 %v1724, %v1749
        %v1757 = vadd.f32 %v1725, %v1751
        %v1758 = vadd.f32 %v1726, %v1753
        %v1759 = vadd.f32 %v1727, %v1755
        %v1760 = vadd.f32 %v1709, 0.5
        %v1761 = vadd.f32 %v1711, 0.5
        %v1762 = vadd.f32 %v1713, 0.5
        %v1763 = vadd.f32 %v1715, 0.5
        %v1764 = vmul.f32 %v1760, 2.0
        %v1765 = vmul.f32 %v1761, 2.0
        %v1766 = vmul.f32 %v1762, 2.0
        %v1767 = vmul.f32 %v1763, 2.0
        %v1768 = vmax.f32 %v1764, 0.0
        %v1769 = vmax.f32 %v1765, 0.0
        %v1770 = vmax.f32 %v1766, 0.0
        %v1771 = vmax.f32 %v1767, 0.0
        %v1772 = vand.u32 2147483647, %v1764
        %v1773 = vand.u32 2147483647, %v1765
        %v1774 = vand.u32 2147483647, %v1766
        %v1775 = vand.u32 2147483647, %v1767
        %v1776 = vsub.f32 0.0, %v1772
        %v1777 = vsub.f32 0.0, %v1773
        %v1778 = vsub.f32 0.0, %v1774
        %v1779 = vsub.f32 0.0, %v1775
        %v1780 = vmul.f32 %v1776, 1.442695
        %v1781 = vpow.pop %v1780
        %v1782 = vmul.f32 %v1777, 1.442695
        %v1783 = vpow.pop %v1782
        %v1784 = vmul.f32 %v1778, 1.442695
        %v1785 = vpow.pop %v1784
        %v1786 = vmul.f32 %v1779, 1.442695
        %v1787 = vpow.pop %v1786
        %v1788 = vadd.f32 %v1781, 1.0
        %v1789 = vadd.f32 %v1783, 1.0
        %v1790 = vadd.f32 %v1785, 1.0
        %v1791 = vadd.f32 %v1787, 1.0
        %v1792 = vlog2.pop %v1788
        %v1793 = vmul.f32 %v1792, 0.6931472
        %v1794 = vlog2.pop %v1789
        %v1795 = vmul.f32 %v1794, 0.6931472
        %v1796 = vlog2.pop %v1790
        %v1797 = vmul.f32 %v1796, 0.6931472
        %v1798 = vlog2.pop %v1791
        %v1799 = vmul.f32 %v1798, 0.6931472
        %v1800 = vadd.f32 %v1768, %v1793
        %v1801 = vadd.f32 %v1769, %v1795
        %v1802 = vadd.f32 %v1770, %v1797
        %v1803 = vadd.f32 %v1771, %v1799
        %v1804 = vadd.f32 %v1756, %v1800
        %v1805 = vadd.f32 %v1757, %v1801
        %v1806 = vadd.f32 %v1758, %v1802
        %v1807 = vadd.f32 %v1759, %v1803
        %s1808 = smul.u32 %s23, 32
        %v1809 = vlaneseq
        %v1810 = vshrl.u32 %v1809, 7
        %v1811 = vadd.s32 %v1810, 8
        %v1812 = vadd.s32 %v1810, 16
        %v1813 = vadd.s32 %v1810, 24
        %v1814 = vstv %s1808
        %v1815 = vadd.s32 %v1814, %v1810
        %v1816 = vadd.s32 %v1814, %v1811
        %v1817 = vadd.s32 %v1814, %v1812
        %v1818 = vadd.s32 %v1814, %v1813
        %vm1819 = vcmp.lt.s32.totalorder %v1815, 64
        %vm1820 = vcmp.lt.s32.totalorder %v1816, 64
        %vm1821 = vcmp.lt.s32.totalorder %v1817, 64
        %vm1822 = vcmp.lt.s32.totalorder %v1818, 64
        %v1823 = vsel %vm1819, %v1804, 0.0
        %v1824 = vsel %vm1820, %v1805, 0.0
        %v1825 = vsel %vm1821, %v1806, 0.0
        %v1826 = vsel %vm1822, %v1807, 0.0
        %vm1827 = vcmask 7168
        %v1828 = vsel %vm1827, %v1823, 0.0
        %v1829 = vsel %vm1827, %v1824, 0.0
        %v1830 = vadd.f32 %v1828, %v1829
        %v1831 = vsel %vm1827, %v1825, 0.0
        %v1832 = vadd.f32 %v1830, %v1831
        %v1833 = vsel %vm1827, %v1826, 0.0
        %v1834 = vadd.f32 %v1832, %v1833
        %1835 = vadd.xlane.f32.xlu0 %v1834
        %v1836 = vpop.xlane.xlu0 %1835
        %v1837 = vrot.slane %v1836, 4
        %v1838 = vadd.f32 %v1836, %v1837
        %v1839 = vrot.slane %v1838, 2
        %v1840 = vadd.f32 %v1838, %v1839
        %v1841 = vrot.slane %v1840, 1
        %v1842 = vadd.f32 %v1840, %v1841
        %s1843 = vtos %v1842
        %v1844 = vstv %s1843
        %1845 = vst [vmem:[%s285] sm:$0xff] %v1844
        %s1846 = sand.u32 %s146, 1
        %s1847 = scalar_lea.sflag [#allocation4], %s1846
        %s1848 = sand.u32 %s146, 1
        %s1849 = smul.addr %s1848, 8
        %s1850 = scalar_lea.vmem [#allocation8], %s1849
        // Predicated region
        $region53: #{tpu_custom_call.1} parent=39 // pred_check
          %p1851 = pneg %p156
        $region54: #{tpu_custom_call.1} parent=39 // pred_check_branch
          %1853 = sbr.rel (%p1851) target = $region56
        $region55: #{tpu_custom_call.1} parent=39 // pred_region
          %s1855 = ssub.s32 128, 128
          %1856 = vsyncadd %s1847, %s1855
          %s1857 = smul.addr %s23, 128
          %s1858 = scalar_lea.hbm %s5, %s1857
          %s1860 = sshll.u32 %s1850, 4
          %s1861 = int_to_ptr.vmem [resolvable:$true] %s1860
          %1863 = dma.vmem_to_hbm [thread:$0]  %s1861, 128, %s1858, %s1847
        $region56: #{tpu_custom_call.1} parent=39 // pred_fallthru
          _
      $region40: #{tpu_custom_call.1} parent=5 // pred_fallthru
        _
      %p1864 = scmp.le.s32.totalorder 2, %s18
      // Predicated region
      $region57: #{tpu_custom_call.1} parent=5 // pred_check
        %p1865 = pneg %p1864
      $region58: #{tpu_custom_call.1} parent=5 // pred_check_branch
        %1867 = sbr.rel (%p1865) target = $region60
      $region59: #{tpu_custom_call.1} parent=5 // pred_region
        %s1868 = ssub.s32 %s18, 2
        // Predicated region
        $region61: #{tpu_custom_call.1} parent=59 // pred_check
          %p1869 = pneg %p162
        $region62: #{tpu_custom_call.1} parent=59 // pred_check_branch
          %1871 = sbr.rel (%p1869) target = $region64
        $region63: #{tpu_custom_call.1} parent=59 // pred_region
          %s1872 = sand.u32 %s147, 1
          %s1873 = scalar_lea.sflag [#allocation4], %s1872
          %s1874 = sand.u32 %s147, 1
          %s1875 = smul.addr %s1874, 8
          %s1876 = scalar_lea.vmem [#allocation8], %s1875
          %1877 = dma.done %s1873, 128
        $region64: #{tpu_custom_call.1} parent=59 // pred_fallthru
          _
      $region60: #{tpu_custom_call.1} parent=5 // pred_fallthru
        _
    $region6: #{tpu_custom_call.1} parent=1 // loop_footer
      %s22 = sadd.s32 1, %s18
    $region7: #{tpu_custom_call.1} parent=1 // loop_footer_branch
      %17 = sbr.rel target = $region3
    $region8: #{tpu_custom_call.1} parent=1 // loop_exit
      _
    %1878 = vsyncpa [#allocation3], 1
    %s1879 = scalar_lea.sflag [#allocation3], 1
    %1880 = vsyncpa %s1879, 1
    %1881 = vsyncpa [#allocation6], 1
    %1882 = vsyncpa [#allocation4], 1
    %s1883 = scalar_lea.sflag [#allocation4], 1
    %1884 = vsyncpa %s1883, 1

</llo_original>
